<compile_context>
chip_gen: v7x
topology: tpu7x:2x2x1
jax: 0.10.0
libtpu: 0.0.40
codegen_flags: <defaults>
</compile_context>

<pallas_src>
import functools

import jax
import jax.numpy as jnp
from jax import lax
from jax.experimental import pallas as pl
from jax.experimental.pallas import tpu as pltpu


def _embed_sum_kernel(seed_ref, idx_ref, emb_ref, out_ref, *,
                      num_labels, pack, dropout_p, training, use_gather):
    # idx_ref : (tile_rows, pack*L) int32  -- `pack` tokens' label ids per row
    # emb_ref : (V, D)                     -- full embedding table, VMEM resident
    # out_ref : (tile_rows, pack*D)        -- `pack` tokens' embedding sums per row
    L = num_labels
    V, D = emb_ref.shape
    tile_rows = out_ref.shape[0]

    idx = idx_ref[...]                      # (tile_rows, pack*L)
    emb = emb_ref[...]                      # (V, D)

    if not use_gather:
        # One-hot counts @ table on the MXU (good for small V). Iota hoisted.
        col = lax.broadcasted_iota(jnp.int32, (tile_rows, V), 1)

    y_slots = []
    for g in range(pack):                   # static, small unrolled loop
        ids_g = idx[:, g * L:(g + 1) * L]   # (tile_rows, L): labels of token slot g
        if use_gather:
            # Gather-and-sum path: O(tile*L*D), independent of V.
            acc = jnp.zeros((tile_rows, D), jnp.float32)
            for l in range(L):
                ids = ids_g[:, l]
                valid = jnp.logical_and(ids >= 0, ids < V)
                safe = jnp.where(valid, ids, 0)
                rows = jnp.take(emb, safe, axis=0).astype(jnp.float32)
                acc = acc + jnp.where(valid[:, None], rows, 0.0)
            y_slots.append(acc)
        else:
            # counts[t, v] = #occurrences of label v among token t's labels.
            counts = jnp.zeros((tile_rows, V), jnp.float32)
            for l in range(L):
                counts = counts + (col == ids_g[:, l:l + 1]).astype(jnp.float32)
            # Exact small integers -> lossless cast; bf16 table => bf16 MXU matmul.
            counts = counts.astype(emb.dtype)
            y_slots.append(jnp.dot(counts, emb,
                                   preferred_element_type=jnp.float32))

    # Assemble a lane-dense (tile_rows, pack*D) slab so the store is full-width.
    y = y_slots[0] if pack == 1 else jnp.concatenate(y_slots, axis=-1)

    if training and (dropout_p is not None) and dropout_p > 0.0:
        # Inverted dropout (F.dropout(training=True)); threshold in integer space.
        # TODO(synk): the mask comes from the TPU PRNG, so it differs bit-for-bit
        # from torch's RNG stream (same Bernoulli(p) distribution).
        pltpu.prng_seed(seed_ref[0] + pl.program_id(0))
        bits = pltpu.bitcast(pltpu.prng_random_bits(y.shape), jnp.uint32)
        thresh = min(int(round(dropout_p * 4294967296.0)), 4294967295)
        keep = bits >= jnp.uint32(thresh)
        scale = 1.0 / (1.0 - dropout_p)      # compile-time constant
        y = jnp.where(keep, y * scale, 0.0)

    out_ref[...] = y.astype(out_ref.dtype)


def multilabel_embedding_tokens(indices, emb_table, *, dropout=0.5,
                                training=False, seed=0, token_tile=256):
    """indices: (T, L) int32 (id 0 = padding); emb_table: (V, D) -> (T, D)."""
    T, L = indices.shape
    V, D = emb_table.shape
    out_dtype = emb_table.dtype

    # Pack `pack` tokens per output row so stores are full 128-lane (lane-dense).
    pack = 128 // D if (D < 128 and 128 % D == 0) else 1

    # token_tile must be a multiple of 8*pack so packed block rows stay sublane-aligned.
    unit = 8 * pack
    token_tile = max(int(token_tile), unit)
    token_tile = ((token_tile + unit - 1) // unit) * unit

    # Pad T up to a multiple of token_tile with label-id-0 rows (sliced off below).
    n_tiles = (T + token_tile - 1) // token_tile
    T_pad = n_tiles * token_tile
    if T_pad != T:
        indices = jnp.pad(indices, ((0, T_pad - T), (0, 0)))

    tile_rows = token_tile // pack
    idx_packed = indices.reshape(T_pad // pack, pack * L)
    out_packed_shape = (T_pad // pack, pack * D)

    # For large vocabularies skip the O(T*V) one-hot work and gather instead.
    use_gather = V > 512

    kernel = functools.partial(_embed_sum_kernel, num_labels=L, pack=pack,
                               dropout_p=dropout, training=training,
                               use_gather=use_gather)
    seed_arr = jnp.array([seed], dtype=jnp.int32)

    # VMEM budget: 2x table (auto double-buffer), 2x idx/out blocks, counts slab.
    itemsize = emb_table.dtype.itemsize
    est = (2 * V * D * itemsize
           + 2 * tile_rows * pack * L * 4
           + 2 * tile_rows * pack * D * 4
           + tile_rows * V * 4
           + token_tile * D * 4)
    vmem_limit = int(min(64 * 1024 * 1024, max(2 * est + (8 << 20), 32 << 20)))

    flops = (2 * T_pad * L * D) if use_gather else (2 * T_pad * V * D + T_pad * V * L)
    bytes_accessed = (V * D * itemsize + T_pad * L * 4
                      + T_pad * D * jnp.dtype(out_dtype).itemsize)

    # TODO(synk): for very large tables on v7x (64 MiB VMEM) the table BlockSpec should
    # use pipeline_mode=pl.Buffered(1) or a V-tiled "arbitrary" grid axis + accumulator;
    # unnecessary at these sizes (the constant block index is only DMA'd once anyway).
    out_packed = pl.pallas_call(
        kernel,
        out_shape=jax.ShapeDtypeStruct(out_packed_shape, out_dtype),
        grid_spec=pltpu.PrefetchScalarGridSpec(
            num_scalar_prefetch=1,            # dropout seed lives in SMEM
            grid=(n_tiles,),
            in_specs=[
                pl.BlockSpec((tile_rows, pack * L), lambda i, seed: (i, 0)),
                pl.BlockSpec((V, D), lambda i, seed: (0, 0)),   # full table resident
            ],
            out_specs=pl.BlockSpec((tile_rows, pack * D), lambda i, seed: (i, 0)),
        ),
        compiler_params=pltpu.CompilerParams(
            dimension_semantics=("parallel",),   # shard token tiles across TCs (v7x)
            vmem_limit_bytes=vmem_limit),
        cost_estimate=pl.CostEstimate(flops=int(flops), transcendentals=0,
                                      bytes_accessed=int(bytes_accessed)),
    )(seed_arr, idx_packed, emb_table)

    return out_packed.reshape(T_pad, D)[:T]


def multilabel_embedding_forward(label_ids, emb_table, *, dropout=0.5,
                                 training=False, seed=0, token_tile=256):
    """label_ids: (B, S, L) int32 -> (B, S, D), matching the PyTorch forward."""
    B, S, L = label_ids.shape
    flat = label_ids.reshape(B * S, L).astype(jnp.int32)
    out = multilabel_embedding_tokens(flat, emb_table, dropout=dropout,
                                      training=training, seed=seed,
                                      token_tile=token_tile)
    return out.reshape(B, S, -1)


if __name__ == "__main__":
    # Small, deterministic setup consistent with the module's __init__.
    num_embeddings, embedding_dim = 32, 32
    batch, seq, num_labels = 2, 8, 4

    key = jax.random.PRNGKey(0)
    k_emb, k_idx = jax.random.split(key)

    # nn.Embedding default init ~ N(0, 1); padding_idx=0 row zeroed.
    emb_table = jax.random.normal(k_emb, (num_embeddings, embedding_dim),
                                  dtype=jnp.float32)
    emb_table = emb_table.at[0].set(0.0)

    # Each token carries `num_labels` label ids (id 0 acts as padding / no-op).
    label_ids = jax.random.randint(k_idx, (batch, seq, num_labels),
                                   0, num_embeddings, dtype=jnp.int32)

    # Eval mode (dropout identity) so the result is deterministic vs the reference.
    out = multilabel_embedding_forward(label_ids, emb_table,
                                       dropout=0.5, training=False)
    out = jax.block_until_ready(out)

    # Pure-JAX reference for the embedding-sum hot path.
    ref = emb_table[label_ids].sum(axis=2)   # (B, S, D)
    assert out.shape == (batch, seq, embedding_dim)
    assert jnp.allclose(out, ref, atol=1e-5, rtol=1e-5), "mismatch vs reference"

    print("KERNEL_OK")
</pallas_src>

<mosaic_0001>
module attributes {stable_mosaic.version = 11 : i64} {
  func.func @_embed_sum_kernel(%arg0: i32, %arg1: memref<1xi32, #tpu.memory_space<smem>>, %arg2: memref<64x16xi32, #tpu.memory_space<vmem>>, %arg3: memref<32x32xf32, #tpu.memory_space<vmem>>, %arg4: memref<64x128xf32, #tpu.memory_space<vmem>>) attributes {dimension_semantics = [#tpu.dimension_semantics<parallel>], iteration_bounds = array<i64: 1>, scalar_prefetch = 1 : i64, scratch_operands = 0 : i64, tpu.core_type = #tpu.core_type<tc>, window_params = [{transform_indices = @transform_0, window_bounds = array<i64: 64, 16>}, {pipeline_mode = #tpu.pipeline_mode<synchronous>, transform_indices = @transform_1, window_bounds = array<i64: 32, 32>}, {transform_indices = @transform_2, window_bounds = array<i64: 64, 128>}]} {
    %c0 = arith.constant 0 : index
    %c0_0 = arith.constant 0 : index
    %0 = vector.load %arg2[%c0, %c0_0] : memref<64x16xi32, #tpu.memory_space<vmem>>, vector<64x16xi32>
    %c0_1 = arith.constant 0 : index
    %c0_2 = arith.constant 0 : index
    %1 = vector.load %arg3[%c0_1, %c0_2] : memref<32x32xf32, #tpu.memory_space<vmem>>, vector<32x32xf32>
    %2 = tpu.iota {dimensions = array<i32: 1>} : vector<64x32xi32>
    %3 = vector.extract_strided_slice %0 {offsets = [0, 0], sizes = [64, 4], strides = [1, 1]} : vector<64x16xi32> to vector<64x4xi32>
    %cst = arith.constant 0.000000e+00 : f32
    %4 = vector.broadcast %cst : f32 to vector<64x32xf32>
    %5 = vector.extract_strided_slice %3 {offsets = [0, 0], sizes = [64, 1], strides = [1, 1]} : vector<64x4xi32> to vector<64x1xi32>
    %6 = vector.broadcast %5 : vector<64x1xi32> to vector<64x32xi32>
    %7 = arith.cmpi eq, %2, %6 : vector<64x32xi32>
    %8 = arith.extui %7 : vector<64x32xi1> to vector<64x32xi32>
    %9 = arith.sitofp %8 : vector<64x32xi32> to vector<64x32xf32>
    %10 = arith.addf %4, %9 : vector<64x32xf32>
    %11 = vector.extract_strided_slice %3 {offsets = [0, 1], sizes = [64, 1], strides = [1, 1]} : vector<64x4xi32> to vector<64x1xi32>
    %12 = vector.broadcast %11 : vector<64x1xi32> to vector<64x32xi32>
    %13 = arith.cmpi eq, %2, %12 : vector<64x32xi32>
    %14 = arith.extui %13 : vector<64x32xi1> to vector<64x32xi32>
    %15 = arith.sitofp %14 : vector<64x32xi32> to vector<64x32xf32>
    %16 = arith.addf %10, %15 : vector<64x32xf32>
    %17 = vector.extract_strided_slice %3 {offsets = [0, 2], sizes = [64, 1], strides = [1, 1]} : vector<64x4xi32> to vector<64x1xi32>
    %18 = vector.broadcast %17 : vector<64x1xi32> to vector<64x32xi32>
    %19 = arith.cmpi eq, %2, %18 : vector<64x32xi32>
    %20 = arith.extui %19 : vector<64x32xi1> to vector<64x32xi32>
    %21 = arith.sitofp %20 : vector<64x32xi32> to vector<64x32xf32>
    %22 = arith.addf %16, %21 : vector<64x32xf32>
    %23 = vector.extract_strided_slice %3 {offsets = [0, 3], sizes = [64, 1], strides = [1, 1]} : vector<64x4xi32> to vector<64x1xi32>
    %24 = vector.broadcast %23 : vector<64x1xi32> to vector<64x32xi32>
    %25 = arith.cmpi eq, %2, %24 : vector<64x32xi32>
    %26 = arith.extui %25 : vector<64x32xi1> to vector<64x32xi32>
    %27 = arith.sitofp %26 : vector<64x32xi32> to vector<64x32xf32>
    %28 = arith.addf %22, %27 : vector<64x32xf32>
    %cst_3 = arith.constant dense<0.000000e+00> : vector<64x32xf32>
    %29 = tpu.matmul %28, %1, %cst_3 {dimension_numbers = #tpu.dot_dimension_numbers<[1], [0], [0], [1], [0, 0, 1, 1], [], []>} : vector<64x32xf32>, vector<32x32xf32>, vector<64x32xf32> -> vector<64x32xf32>
    %30 = vector.extract_strided_slice %0 {offsets = [0, 4], sizes = [64, 4], strides = [1, 1]} : vector<64x16xi32> to vector<64x4xi32>
    %cst_4 = arith.constant 0.000000e+00 : f32
    %31 = vector.broadcast %cst_4 : f32 to vector<64x32xf32>
    %32 = vector.extract_strided_slice %30 {offsets = [0, 0], sizes = [64, 1], strides = [1, 1]} : vector<64x4xi32> to vector<64x1xi32>
    %33 = vector.broadcast %32 : vector<64x1xi32> to vector<64x32xi32>
    %34 = arith.cmpi eq, %2, %33 : vector<64x32xi32>
    %35 = arith.extui %34 : vector<64x32xi1> to vector<64x32xi32>
    %36 = arith.sitofp %35 : vector<64x32xi32> to vector<64x32xf32>
    %37 = arith.addf %31, %36 : vector<64x32xf32>
    %38 = vector.extract_strided_slice %30 {offsets = [0, 1], sizes = [64, 1], strides = [1, 1]} : vector<64x4xi32> to vector<64x1xi32>
    %39 = vector.broadcast %38 : vector<64x1xi32> to vector<64x32xi32>
    %40 = arith.cmpi eq, %2, %39 : vector<64x32xi32>
    %41 = arith.extui %40 : vector<64x32xi1> to vector<64x32xi32>
    %42 = arith.sitofp %41 : vector<64x32xi32> to vector<64x32xf32>
    %43 = arith.addf %37, %42 : vector<64x32xf32>
    %44 = vector.extract_strided_slice %30 {offsets = [0, 2], sizes = [64, 1], strides = [1, 1]} : vector<64x4xi32> to vector<64x1xi32>
    %45 = vector.broadcast %44 : vector<64x1xi32> to vector<64x32xi32>
    %46 = arith.cmpi eq, %2, %45 : vector<64x32xi32>
    %47 = arith.extui %46 : vector<64x32xi1> to vector<64x32xi32>
    %48 = arith.sitofp %47 : vector<64x32xi32> to vector<64x32xf32>
    %49 = arith.addf %43, %48 : vector<64x32xf32>
    %50 = vector.extract_strided_slice %30 {offsets = [0, 3], sizes = [64, 1], strides = [1, 1]} : vector<64x4xi32> to vector<64x1xi32>
    %51 = vector.broadcast %50 : vector<64x1xi32> to vector<64x32xi32>
    %52 = arith.cmpi eq, %2, %51 : vector<64x32xi32>
    %53 = arith.extui %52 : vector<64x32xi1> to vector<64x32xi32>
    %54 = arith.sitofp %53 : vector<64x32xi32> to vector<64x32xf32>
    %55 = arith.addf %49, %54 : vector<64x32xf32>
    %cst_5 = arith.constant dense<0.000000e+00> : vector<64x32xf32>
    %56 = tpu.matmul %55, %1, %cst_5 {dimension_numbers = #tpu.dot_dimension_numbers<[1], [0], [0], [1], [0, 0, 1, 1], [], []>} : vector<64x32xf32>, vector<32x32xf32>, vector<64x32xf32> -> vector<64x32xf32>
    %57 = vector.extract_strided_slice %0 {offsets = [0, 8], sizes = [64, 4], strides = [1, 1]} : vector<64x16xi32> to vector<64x4xi32>
    %cst_6 = arith.constant 0.000000e+00 : f32
    %58 = vector.broadcast %cst_6 : f32 to vector<64x32xf32>
    %59 = vector.extract_strided_slice %57 {offsets = [0, 0], sizes = [64, 1], strides = [1, 1]} : vector<64x4xi32> to vector<64x1xi32>
    %60 = vector.broadcast %59 : vector<64x1xi32> to vector<64x32xi32>
    %61 = arith.cmpi eq, %2, %60 : vector<64x32xi32>
    %62 = arith.extui %61 : vector<64x32xi1> to vector<64x32xi32>
    %63 = arith.sitofp %62 : vector<64x32xi32> to vector<64x32xf32>
    %64 = arith.addf %58, %63 : vector<64x32xf32>
    %65 = vector.extract_strided_slice %57 {offsets = [0, 1], sizes = [64, 1], strides = [1, 1]} : vector<64x4xi32> to vector<64x1xi32>
    %66 = vector.broadcast %65 : vector<64x1xi32> to vector<64x32xi32>
    %67 = arith.cmpi eq, %2, %66 : vector<64x32xi32>
    %68 = arith.extui %67 : vector<64x32xi1> to vector<64x32xi32>
    %69 = arith.sitofp %68 : vector<64x32xi32> to vector<64x32xf32>
    %70 = arith.addf %64, %69 : vector<64x32xf32>
    %71 = vector.extract_strided_slice %57 {offsets = [0, 2], sizes = [64, 1], strides = [1, 1]} : vector<64x4xi32> to vector<64x1xi32>
    %72 = vector.broadcast %71 : vector<64x1xi32> to vector<64x32xi32>
    %73 = arith.cmpi eq, %2, %72 : vector<64x32xi32>
    %74 = arith.extui %73 : vector<64x32xi1> to vector<64x32xi32>
    %75 = arith.sitofp %74 : vector<64x32xi32> to vector<64x32xf32>
    %76 = arith.addf %70, %75 : vector<64x32xf32>
    %77 = vector.extract_strided_slice %57 {offsets = [0, 3], sizes = [64, 1], strides = [1, 1]} : vector<64x4xi32> to vector<64x1xi32>
    %78 = vector.broadcast %77 : vector<64x1xi32> to vector<64x32xi32>
    %79 = arith.cmpi eq, %2, %78 : vector<64x32xi32>
    %80 = arith.extui %79 : vector<64x32xi1> to vector<64x32xi32>
    %81 = arith.sitofp %80 : vector<64x32xi32> to vector<64x32xf32>
    %82 = arith.addf %76, %81 : vector<64x32xf32>
    %cst_7 = arith.constant dense<0.000000e+00> : vector<64x32xf32>
    %83 = tpu.matmul %82, %1, %cst_7 {dimension_numbers = #tpu.dot_dimension_numbers<[1], [0], [0], [1], [0, 0, 1, 1], [], []>} : vector<64x32xf32>, vector<32x32xf32>, vector<64x32xf32> -> vector<64x32xf32>
    %84 = vector.extract_strided_slice %0 {offsets = [0, 12], sizes = [64, 4], strides = [1, 1]} : vector<64x16xi32> to vector<64x4xi32>
    %cst_8 = arith.constant 0.000000e+00 : f32
    %85 = vector.broadcast %cst_8 : f32 to vector<64x32xf32>
    %86 = vector.extract_strided_slice %84 {offsets = [0, 0], sizes = [64, 1], strides = [1, 1]} : vector<64x4xi32> to vector<64x1xi32>
    %87 = vector.broadcast %86 : vector<64x1xi32> to vector<64x32xi32>
    %88 = arith.cmpi eq, %2, %87 : vector<64x32xi32>
    %89 = arith.extui %88 : vector<64x32xi1> to vector<64x32xi32>
    %90 = arith.sitofp %89 : vector<64x32xi32> to vector<64x32xf32>
    %91 = arith.addf %85, %90 : vector<64x32xf32>
    %92 = vector.extract_strided_slice %84 {offsets = [0, 1], sizes = [64, 1], strides = [1, 1]} : vector<64x4xi32> to vector<64x1xi32>
    %93 = vector.broadcast %92 : vector<64x1xi32> to vector<64x32xi32>
    %94 = arith.cmpi eq, %2, %93 : vector<64x32xi32>
    %95 = arith.extui %94 : vector<64x32xi1> to vector<64x32xi32>
    %96 = arith.sitofp %95 : vector<64x32xi32> to vector<64x32xf32>
    %97 = arith.addf %91, %96 : vector<64x32xf32>
    %98 = vector.extract_strided_slice %84 {offsets = [0, 2], sizes = [64, 1], strides = [1, 1]} : vector<64x4xi32> to vector<64x1xi32>
    %99 = vector.broadcast %98 : vector<64x1xi32> to vector<64x32xi32>
    %100 = arith.cmpi eq, %2, %99 : vector<64x32xi32>
    %101 = arith.extui %100 : vector<64x32xi1> to vector<64x32xi32>
    %102 = arith.sitofp %101 : vector<64x32xi32> to vector<64x32xf32>
    %103 = arith.addf %97, %102 : vector<64x32xf32>
    %104 = vector.extract_strided_slice %84 {offsets = [0, 3], sizes = [64, 1], strides = [1, 1]} : vector<64x4xi32> to vector<64x1xi32>
    %105 = vector.broadcast %104 : vector<64x1xi32> to vector<64x32xi32>
    %106 = arith.cmpi eq, %2, %105 : vector<64x32xi32>
    %107 = arith.extui %106 : vector<64x32xi1> to vector<64x32xi32>
    %108 = arith.sitofp %107 : vector<64x32xi32> to vector<64x32xf32>
    %109 = arith.addf %103, %108 : vector<64x32xf32>
    %cst_9 = arith.constant dense<0.000000e+00> : vector<64x32xf32>
    %110 = tpu.matmul %109, %1, %cst_9 {dimension_numbers = #tpu.dot_dimension_numbers<[1], [0], [0], [1], [0, 0, 1, 1], [], []>} : vector<64x32xf32>, vector<32x32xf32>, vector<64x32xf32> -> vector<64x32xf32>
    %111 = tpu.concatenate %29, %56, %83, %110 in 1 : vector<64x32xf32>, vector<64x32xf32>, vector<64x32xf32>, vector<64x32xf32> -> vector<64x128xf32>
    %c0_10 = arith.constant 0 : index
    %c0_11 = arith.constant 0 : index
    %112 = vector.load %arg4[%c0_10, %c0_11] : memref<64x128xf32, #tpu.memory_space<vmem>>, vector<64x128xf32>
    tpu.vector_store %arg4[%c0_10, %c0_11], %111 {strides = array<i32>} : memref<64x128xf32, #tpu.memory_space<vmem>>, vector<64x128xf32>,
    return
  }
  func.func @transform_0(%arg0: i32, %arg1: memref<1xi32, #tpu.memory_space<smem>>) -> (i32, i32) {
    %c0_i32 = arith.constant 0 : i32
    %c0_i32_0 = arith.constant 0 : i32
    return %arg0, %c0_i32 : i32, i32
  }
  func.func @transform_1(%arg0: i32, %arg1: memref<1xi32, #tpu.memory_space<smem>>) -> (i32, i32) {
    %c0_i32 = arith.constant 0 : i32
    %c0_i32_0 = arith.constant 0 : i32
    %c0_i32_1 = arith.constant 0 : i32
    return %c0_i32, %c0_i32_0 : i32, i32
  }
  func.func @transform_2(%arg0: i32, %arg1: memref<1xi32, #tpu.memory_space<smem>>) -> (i32, i32) {
    %c0_i32 = arith.constant 0 : i32
    %c0_i32_0 = arith.constant 0 : i32
    return %arg0, %c0_i32 : i32, i32
  }
}

</mosaic_0001>

<llo_original>
// kernel: tpu_custom_call.1
$region0: #{tpu_custom_call.1}
  #allocation0 [shape = 'u32[]', space=smem, size = 0x4, offset = 0x4, fixed_abs, tag = 'smem constant byte address 0x4 - core index']
  #allocation1 [shape = 'u32[144,128]{1,0:T(1,128)}', space=vmem, size = 0x12000, scoped, tag = 'internal scratch']
  #allocation2 [shape = 's32[1]{0}', space=sflag, size = 0x4, scoped, tag = 'scoped memory for tpu_custom_call.1']
  #allocation3 [shape = 's32[1]{0:T(128)S(6)}', space=smem, size = 0x200, scoped, tag = 'prefetched SMEM operand 0']
  %s0 = inlined_call_operand.<no memory space> [shape: s32[1], index: 0, kind: input, shape index: {}]
  %s1 = inlined_call_operand.vmem [shape: s32[64,16], index: 1, kind: input, shape index: {}]
  %s2 = inlined_call_operand.vmem [shape: f32[32,32], index: 2, kind: input, shape index: {}]
  %s3 = inlined_call_operand.hbm [shape: f32[64,128], index: 3, kind: output, shape index: {}]
  %s4 = sld [smem:[#allocation0]]
  $region18: #{tpu_custom_call.1} parent=0
    _
  %s6 = ssub.s32 1, %s4
  %s7 = scalar_select 0, %s6, %s4
  %8 = sst [smem:[#allocation3]] %s0
  $region1: #{tpu_custom_call.1} parent=0
    #allocation4 [shape = 'u8[32768]{0}', space=vmem, size = 0x8000, scoped, tag = 'output window, operand 0, single buffered']
    #allocation5 [shape = 's32[1]{0}', space=sflag, size = 0x4, scoped, tag = 'scoped memory for tpu_custom_call.1']
    %9 = vsyncpa [#allocation5], 0
    // Predicated region
    $region2: #{tpu_custom_call.1} parent=1 // pred_check
      _
    $region3: #{tpu_custom_call.1} parent=1 // pred_check_branch
      %11 = sbr.rel (0) target = $region5
    $region4: #{tpu_custom_call.1} parent=1 // pred_region
      _
    $region5: #{tpu_custom_call.1} parent=1 // pred_fallthru
      _
    // Predicated region
    $region6: #{tpu_custom_call.1} parent=1 // pred_check
      _
    $region7: #{tpu_custom_call.1} parent=1 // pred_check_branch
      %13 = sbr.rel (0) target = $region9
    $region8: #{tpu_custom_call.1} parent=1 // pred_region
      _
    $region9: #{tpu_custom_call.1} parent=1 // pred_fallthru
      _
    %v14 = vld [vmem:[%s1] sm:$0xff]
    %v15 = vld [vmem:[%s1 + $0x8] sm:$0xff]
    %v16 = vld [vmem:[%s1 + $0x10] sm:$0xff]
    %v17 = vld [vmem:[%s1 + $0x18] sm:$0xff]
    %v18 = vld [vmem:[%s1 + $0x20] sm:$0xff]
    %v19 = vld [vmem:[%s1 + $0x28] sm:$0xff]
    %v20 = vld [vmem:[%s1 + $0x30] sm:$0xff]
    %v21 = vld [vmem:[%s1 + $0x38] sm:$0xff]
    %v22 = vld [vmem:[%s2] sm:$0xff]
    %v23 = vld [vmem:[%s2 + $0x8] sm:$0xff]
    %v24 = vld [vmem:[%s2 + $0x10] sm:$0xff]
    %v25 = vld [vmem:[%s2 + $0x18] sm:$0xff]
    %v26 = vlaneseq
    %v27 = vand.u32 %v26, 127
    %28 = vset.pattern.permute.xlu0 0
    %29 = vperm.xlu0 %28, %v14
    %v30 = vpop.permute.xlu0 %29
    %31 = vset.pattern.permute.xlu0 0
    %32 = vperm.xlu0 %31, %v15
    %v33 = vpop.permute.xlu0 %32
    %34 = vset.pattern.permute.xlu0 0
    %35 = vperm.xlu0 %34, %v16
    %v36 = vpop.permute.xlu0 %35
    %37 = vset.pattern.permute.xlu0 0
    %38 = vperm.xlu0 %37, %v17
    %v39 = vpop.permute.xlu0 %38
    %40 = vset.pattern.permute.xlu0 0
    %41 = vperm.xlu0 %40, %v18
    %v42 = vpop.permute.xlu0 %41
    %43 = vset.pattern.permute.xlu0 0
    %44 = vperm.xlu0 %43, %v19
    %v45 = vpop.permute.xlu0 %44
    %46 = vset.pattern.permute.xlu0 0
    %47 = vperm.xlu0 %46, %v20
    %v48 = vpop.permute.xlu0 %47
    %49 = vset.pattern.permute.xlu0 0
    %50 = vperm.xlu0 %49, %v21
    %v51 = vpop.permute.xlu0 %50
    %vm52 = vcmp.eq.s32.totalorder %v27, %v30
    %vm53 = vcmp.eq.s32.totalorder %v27, %v33
    %vm54 = vcmp.eq.s32.totalorder %v27, %v36
    %vm55 = vcmp.eq.s32.totalorder %v27, %v39
    %vm56 = vcmp.eq.s32.totalorder %v27, %v42
    %vm57 = vcmp.eq.s32.totalorder %v27, %v45
    %vm58 = vcmp.eq.s32.totalorder %v27, %v48
    %vm59 = vcmp.eq.s32.totalorder %v27, %v51
    %v60 = vsel %vm52, 1, 0
    %v61 = vsel %vm53, 1, 0
    %v62 = vsel %vm54, 1, 0
    %v63 = vsel %vm55, 1, 0
    %v64 = vsel %vm56, 1, 0
    %v65 = vsel %vm57, 1, 0
    %v66 = vsel %vm58, 1, 0
    %v67 = vsel %vm59, 1, 0
    %v68 = vcvt.s32.f32 %v60
    %v69 = vcvt.s32.f32 %v61
    %v70 = vcvt.s32.f32 %v62
    %v71 = vcvt.s32.f32 %v63
    %v72 = vcvt.s32.f32 %v64
    %v73 = vcvt.s32.f32 %v65
    %v74 = vcvt.s32.f32 %v66
    %v75 = vcvt.s32.f32 %v67
    %v76 = vadd.f32 %v68, 0.0
    %v77 = vadd.f32 %v69, 0.0
    %v78 = vadd.f32 %v70, 0.0
    %v79 = vadd.f32 %v71, 0.0
    %v80 = vadd.f32 %v72, 0.0
    %v81 = vadd.f32 %v73, 0.0
    %v82 = vadd.f32 %v74, 0.0
    %v83 = vadd.f32 %v75, 0.0
    %84 = vset.pattern.permute.xlu0 1
    %85 = vperm.xlu0 %84, %v14
    %v86 = vpop.permute.xlu0 %85
    %87 = vset.pattern.permute.xlu0 1
    %88 = vperm.xlu0 %87, %v15
    %v89 = vpop.permute.xlu0 %88
    %90 = vset.pattern.permute.xlu0 1
    %91 = vperm.xlu0 %90, %v16
    %v92 = vpop.permute.xlu0 %91
    %93 = vset.pattern.permute.xlu0 1
    %94 = vperm.xlu0 %93, %v17
    %v95 = vpop.permute.xlu0 %94
    %96 = vset.pattern.permute.xlu0 1
    %97 = vperm.xlu0 %96, %v18
    %v98 = vpop.permute.xlu0 %97
    %99 = vset.pattern.permute.xlu0 1
    %100 = vperm.xlu0 %99, %v19
    %v101 = vpop.permute.xlu0 %100
    %102 = vset.pattern.permute.xlu0 1
    %103 = vperm.xlu0 %102, %v20
    %v104 = vpop.permute.xlu0 %103
    %105 = vset.pattern.permute.xlu0 1
    %106 = vperm.xlu0 %105, %v21
    %v107 = vpop.permute.xlu0 %106
    %vm108 = vcmp.eq.s32.totalorder %v27, %v86
    %vm109 = vcmp.eq.s32.totalorder %v27, %v89
    %vm110 = vcmp.eq.s32.totalorder %v27, %v92
    %vm111 = vcmp.eq.s32.totalorder %v27, %v95
    %vm112 = vcmp.eq.s32.totalorder %v27, %v98
    %vm113 = vcmp.eq.s32.totalorder %v27, %v101
    %vm114 = vcmp.eq.s32.totalorder %v27, %v104
    %vm115 = vcmp.eq.s32.totalorder %v27, %v107
    %v116 = vsel %vm108, 1, 0
    %v117 = vsel %vm109, 1, 0
    %v118 = vsel %vm110, 1, 0
    %v119 = vsel %vm111, 1, 0
    %v120 = vsel %vm112, 1, 0
    %v121 = vsel %vm113, 1, 0
    %v122 = vsel %vm114, 1, 0
    %v123 = vsel %vm115, 1, 0
    %v124 = vcvt.s32.f32 %v116
    %v125 = vcvt.s32.f32 %v117
    %v126 = vcvt.s32.f32 %v118
    %v127 = vcvt.s32.f32 %v119
    %v128 = vcvt.s32.f32 %v120
    %v129 = vcvt.s32.f32 %v121
    %v130 = vcvt.s32.f32 %v122
    %v131 = vcvt.s32.f32 %v123
    %v132 = vadd.f32 %v76, %v124
    %v133 = vadd.f32 %v77, %v125
    %v134 = vadd.f32 %v78, %v126
    %v135 = vadd.f32 %v79, %v127
    %v136 = vadd.f32 %v80, %v128
    %v137 = vadd.f32 %v81, %v129
    %v138 = vadd.f32 %v82, %v130
    %v139 = vadd.f32 %v83, %v131
    %140 = vset.pattern.permute.xlu0 2
    %141 = vperm.xlu0 %140, %v14
    %v142 = vpop.permute.xlu0 %141
    %143 = vset.pattern.permute.xlu0 2
    %144 = vperm.xlu0 %143, %v15
    %v145 = vpop.permute.xlu0 %144
    %146 = vset.pattern.permute.xlu0 2
    %147 = vperm.xlu0 %146, %v16
    %v148 = vpop.permute.xlu0 %147
    %149 = vset.pattern.permute.xlu0 2
    %150 = vperm.xlu0 %149, %v17
    %v151 = vpop.permute.xlu0 %150
    %152 = vset.pattern.permute.xlu0 2
    %153 = vperm.xlu0 %152, %v18
    %v154 = vpop.permute.xlu0 %153
    %155 = vset.pattern.permute.xlu0 2
    %156 = vperm.xlu0 %155, %v19
    %v157 = vpop.permute.xlu0 %156
    %158 = vset.pattern.permute.xlu0 2
    %159 = vperm.xlu0 %158, %v20
    %v160 = vpop.permute.xlu0 %159
    %161 = vset.pattern.permute.xlu0 2
    %162 = vperm.xlu0 %161, %v21
    %v163 = vpop.permute.xlu0 %162
    %vm164 = vcmp.eq.s32.totalorder %v27, %v142
    %vm165 = vcmp.eq.s32.totalorder %v27, %v145
    %vm166 = vcmp.eq.s32.totalorder %v27, %v148
    %vm167 = vcmp.eq.s32.totalorder %v27, %v151
    %vm168 = vcmp.eq.s32.totalorder %v27, %v154
    %vm169 = vcmp.eq.s32.totalorder %v27, %v157
    %vm170 = vcmp.eq.s32.totalorder %v27, %v160
    %vm171 = vcmp.eq.s32.totalorder %v27, %v163
    %v172 = vsel %vm164, 1, 0
    %v173 = vsel %vm165, 1, 0
    %v174 = vsel %vm166, 1, 0
    %v175 = vsel %vm167, 1, 0
    %v176 = vsel %vm168, 1, 0
    %v177 = vsel %vm169, 1, 0
    %v178 = vsel %vm170, 1, 0
    %v179 = vsel %vm171, 1, 0
    %v180 = vcvt.s32.f32 %v172
    %v181 = vcvt.s32.f32 %v173
    %v182 = vcvt.s32.f32 %v174
    %v183 = vcvt.s32.f32 %v175
    %v184 = vcvt.s32.f32 %v176
    %v185 = vcvt.s32.f32 %v177
    %v186 = vcvt.s32.f32 %v178
    %v187 = vcvt.s32.f32 %v179
    %v188 = vadd.f32 %v132, %v180
    %v189 = vadd.f32 %v133, %v181
    %v190 = vadd.f32 %v134, %v182
    %v191 = vadd.f32 %v135, %v183
    %v192 = vadd.f32 %v136, %v184
    %v193 = vadd.f32 %v137, %v185
    %v194 = vadd.f32 %v138, %v186
    %v195 = vadd.f32 %v139, %v187
    %196 = vset.pattern.permute.xlu0 3
    %197 = vperm.xlu0 %196, %v14
    %v198 = vpop.permute.xlu0 %197
    %199 = vset.pattern.permute.xlu0 3
    %200 = vperm.xlu0 %199, %v15
    %v201 = vpop.permute.xlu0 %200
    %202 = vset.pattern.permute.xlu0 3
    %203 = vperm.xlu0 %202, %v16
    %v204 = vpop.permute.xlu0 %203
    %205 = vset.pattern.permute.xlu0 3
    %206 = vperm.xlu0 %205, %v17
    %v207 = vpop.permute.xlu0 %206
    %208 = vset.pattern.permute.xlu0 3
    %209 = vperm.xlu0 %208, %v18
    %v210 = vpop.permute.xlu0 %209
    %211 = vset.pattern.permute.xlu0 3
    %212 = vperm.xlu0 %211, %v19
    %v213 = vpop.permute.xlu0 %212
    %214 = vset.pattern.permute.xlu0 3
    %215 = vperm.xlu0 %214, %v20
    %v216 = vpop.permute.xlu0 %215
    %217 = vset.pattern.permute.xlu0 3
    %218 = vperm.xlu0 %217, %v21
    %v219 = vpop.permute.xlu0 %218
    %vm220 = vcmp.eq.s32.totalorder %v27, %v198
    %vm221 = vcmp.eq.s32.totalorder %v27, %v201
    %vm222 = vcmp.eq.s32.totalorder %v27, %v204
    %vm223 = vcmp.eq.s32.totalorder %v27, %v207
    %vm224 = vcmp.eq.s32.totalorder %v27, %v210
    %vm225 = vcmp.eq.s32.totalorder %v27, %v213
    %vm226 = vcmp.eq.s32.totalorder %v27, %v216
    %vm227 = vcmp.eq.s32.totalorder %v27, %v219
    %v228 = vsel %vm220, 1, 0
    %v229 = vsel %vm221, 1, 0
    %v230 = vsel %vm222, 1, 0
    %v231 = vsel %vm223, 1, 0
    %v232 = vsel %vm224, 1, 0
    %v233 = vsel %vm225, 1, 0
    %v234 = vsel %vm226, 1, 0
    %v235 = vsel %vm227, 1, 0
    %v236 = vcvt.s32.f32 %v228
    %v237 = vcvt.s32.f32 %v229
    %v238 = vcvt.s32.f32 %v230
    %v239 = vcvt.s32.f32 %v231
    %v240 = vcvt.s32.f32 %v232
    %v241 = vcvt.s32.f32 %v233
    %v242 = vcvt.s32.f32 %v234
    %v243 = vcvt.s32.f32 %v235
    %v244 = vadd.f32 %v188, %v236
    %v245 = vadd.f32 %v189, %v237
    %v246 = vadd.f32 %v190, %v238
    %v247 = vadd.f32 %v191, %v239
    %v248 = vadd.f32 %v192, %v240
    %v249 = vadd.f32 %v193, %v241
    %v250 = vadd.f32 %v194, %v242
    %v251 = vadd.f32 %v195, %v243
    %vm252 = vcmask 261120
    %v254 = vsel %vm252, %v244, 0
    %v257 = vsel %vm252, %v245, 0
    %v260 = vsel %vm252, %v246, 0
    %v263 = vsel %vm252, %v247, 0
    %v266 = vsel %vm252, %v248, 0
    %v269 = vsel %vm252, %v249, 0
    %v272 = vsel %vm252, %v250, 0
    %v275 = vsel %vm252, %v251, 0
    %277 = vmatprep.subr.mxu0 0.0
    %278 = vmatpush1.msra.mxu0 %v22
    %279 = vmatprep.subr.mxu0 0.0
    %280 = vmatpush1.msra.mxu0 %v23
    %281 = vmatprep.subr.mxu0 0.0
    %282 = vmatpush1.msra.mxu0 %v24
    %283 = vmatprep.subr.mxu0 0.0
    %284 = vmatpush1.msra.mxu0 %v25
    %285 = vmatprep.subr.mxu0 0.0
    %286 = vmatpush1.msra.mxu0 0.0
    %287 = vmatprep.subr.mxu0 0.0
    %288 = vmatpush1.msra.mxu0 0.0
    %289 = vmatprep.subr.mxu0 0.0
    %290 = vmatpush1.msra.mxu0 0.0
    %291 = vmatprep.subr.mxu0 0.0
    %292 = vmatpush1.msra.mxu0 0.0
    %293 = vmatprep.subr.mxu0 0.0
    %294 = vmatpush1.msra.mxu0 0.0
    %295 = vmatprep.subr.mxu0 0.0
    %296 = vmatpush1.msra.mxu0 0.0
    %297 = vmatprep.subr.mxu0 0.0
    %298 = vmatpush1.msra.mxu0 0.0
    %299 = vmatprep.subr.mxu0 0.0
    %300 = vmatpush1.msra.mxu0 0.0
    %301 = vmatprep.subr.mxu0 0.0
    %302 = vmatpush1.msra.mxu0 0.0
    %303 = vmatprep.subr.mxu0 0.0
    %304 = vmatpush1.msra.mxu0 0.0
    %305 = vmatprep.subr.mxu0 0.0
    %306 = vmatpush1.msra.mxu0 0.0
    %307 = vmatprep.subr.mxu0 0.0
    %308 = vmatpush1.msra.mxu0 0.0
    %309 = vmatprep.subr.mxu0 0.0
    %310 = vmatpush1.msra.mxu0 0.0
    %311 = vmatprep.subr.mxu0 0.0
    %312 = vmatpush1.msra.mxu0 0.0
    %313 = vmatprep.subr.mxu0 0.0
    %314 = vmatpush1.msra.mxu0 0.0
    %315 = vmatprep.subr.mxu0 0.0
    %316 = vmatpush1.msra.mxu0 0.0
    %317 = vmatprep.subr.mxu0 0.0
    %318 = vmatpush1.msra.mxu0 0.0
    %319 = vmatprep.subr.mxu0 0.0
    %320 = vmatpush1.msra.mxu0 0.0
    %321 = vmatprep.subr.mxu0 0.0
    %322 = vmatpush1.msra.mxu0 0.0
    %323 = vmatprep.subr.mxu0 0.0
    %324 = vmatpush1.msra.mxu0 0.0
    %325 = vmatprep.subr.mxu0 0.0
    %326 = vmatpush1.msra.mxu0 0.0
    %327 = vmatprep.subr.mxu0 0.0
    %328 = vmatpush1.msra.mxu0 0.0
    %329 = vmatprep.subr.mxu0 0.0
    %330 = vmatpush1.msra.mxu0 0.0
    %331 = vmatprep.subr.mxu0 0.0
    %332 = vmatpush1.msra.mxu0 0.0
    %333 = vmatprep.subr.mxu0 0.0
    %334 = vmatpush1.msra.mxu0 0.0
    %335 = vmatprep.subr.mxu0 0.0
    %336 = vmatpush1.msra.mxu0 0.0
    %337 = vmatprep.subr.mxu0 0.0
    %338 = vmatpush1.msra.mxu0 0.0
    %339 = vmatprep.subr.mxu0 0.0
    %340 = vmatpush1.msra.mxu0 0.0
    %341 = vmatprep.mubr.f32.mxu0 0.0
    %342 = vmatmul.mubr.f32.gmra.mrb[0].mxu0 %v254
    %v343 = vpop.f32.mrb[0].mxu0
    %v344 = vadd.f32 0.0, %v343
    %v345 = vpop.f32.mrb[0].mxu0
    %346 = vmatprep.mubr.f32.mxu0 0.0
    %347 = vmatmul.mubr.f32.gmra.mrb[0].mxu0 %v257
    %v348 = vpop.f32.mrb[0].mxu0
    %v349 = vadd.f32 0.0, %v348
    %v350 = vpop.f32.mrb[0].mxu0
    %351 = vmatprep.mubr.f32.mxu0 0.0
    %352 = vmatmul.mubr.f32.gmra.mrb[0].mxu0 %v260
    %v353 = vpop.f32.mrb[0].mxu0
    %v354 = vadd.f32 0.0, %v353
    %v355 = vpop.f32.mrb[0].mxu0
    %356 = vmatprep.mubr.f32.mxu0 0.0
    %357 = vmatmul.mubr.f32.gmra.mrb[0].mxu0 %v263
    %v358 = vpop.f32.mrb[0].mxu0
    %v359 = vadd.f32 0.0, %v358
    %v360 = vpop.f32.mrb[0].mxu0
    %361 = vmatprep.mubr.f32.mxu0 0.0
    %362 = vmatmul.mubr.f32.gmra.mrb[0].mxu0 %v266
    %v363 = vpop.f32.mrb[0].mxu0
    %v364 = vadd.f32 0.0, %v363
    %v365 = vpop.f32.mrb[0].mxu0
    %366 = vmatprep.mubr.f32.mxu0 0.0
    %367 = vmatmul.mubr.f32.gmra.mrb[0].mxu0 %v269
    %v368 = vpop.f32.mrb[0].mxu0
    %v369 = vadd.f32 0.0, %v368
    %v370 = vpop.f32.mrb[0].mxu0
    %371 = vmatprep.mubr.f32.mxu0 0.0
    %372 = vmatmul.mubr.f32.gmra.mrb[0].mxu0 %v272
    %v373 = vpop.f32.mrb[0].mxu0
    %v374 = vadd.f32 0.0, %v373
    %v375 = vpop.f32.mrb[0].mxu0
    %376 = vmatprep.mubr.f32.mxu0 0.0
    %377 = vmatmul.mubr.f32.gmra.mrb[0].mxu0 %v275
    %v378 = vpop.f32.mrb[0].mxu0
    %v379 = vadd.f32 0.0, %v378
    %v380 = vpop.f32.mrb[0].mxu0
    %381 = vdwg.mxu0
    %382 = vset.pattern.permute.xlu0 4
    %383 = vperm.xlu0 %382, %v14
    %v384 = vpop.permute.xlu0 %383
    %385 = vset.pattern.permute.xlu0 4
    %386 = vperm.xlu0 %385, %v15
    %v387 = vpop.permute.xlu0 %386
    %388 = vset.pattern.permute.xlu0 4
    %389 = vperm.xlu0 %388, %v16
    %v390 = vpop.permute.xlu0 %389
    %391 = vset.pattern.permute.xlu0 4
    %392 = vperm.xlu0 %391, %v17
    %v393 = vpop.permute.xlu0 %392
    %394 = vset.pattern.permute.xlu0 4
    %395 = vperm.xlu0 %394, %v18
    %v396 = vpop.permute.xlu0 %395
    %397 = vset.pattern.permute.xlu0 4
    %398 = vperm.xlu0 %397, %v19
    %v399 = vpop.permute.xlu0 %398
    %400 = vset.pattern.permute.xlu0 4
    %401 = vperm.xlu0 %400, %v20
    %v402 = vpop.permute.xlu0 %401
    %403 = vset.pattern.permute.xlu0 4
    %404 = vperm.xlu0 %403, %v21
    %v405 = vpop.permute.xlu0 %404
    %vm406 = vcmp.eq.s32.totalorder %v27, %v384
    %vm407 = vcmp.eq.s32.totalorder %v27, %v387
    %vm408 = vcmp.eq.s32.totalorder %v27, %v390
    %vm409 = vcmp.eq.s32.totalorder %v27, %v393
    %vm410 = vcmp.eq.s32.totalorder %v27, %v396
    %vm411 = vcmp.eq.s32.totalorder %v27, %v399
    %vm412 = vcmp.eq.s32.totalorder %v27, %v402
    %vm413 = vcmp.eq.s32.totalorder %v27, %v405
    %v414 = vsel %vm406, 1, 0
    %v415 = vsel %vm407, 1, 0
    %v416 = vsel %vm408, 1, 0
    %v417 = vsel %vm409, 1, 0
    %v418 = vsel %vm410, 1, 0
    %v419 = vsel %vm411, 1, 0
    %v420 = vsel %vm412, 1, 0
    %v421 = vsel %vm413, 1, 0
    %v422 = vcvt.s32.f32 %v414
    %v423 = vcvt.s32.f32 %v415
    %v424 = vcvt.s32.f32 %v416
    %v425 = vcvt.s32.f32 %v417
    %v426 = vcvt.s32.f32 %v418
    %v427 = vcvt.s32.f32 %v419
    %v428 = vcvt.s32.f32 %v420
    %v429 = vcvt.s32.f32 %v421
    %v430 = vadd.f32 %v422, 0.0
    %v431 = vadd.f32 %v423, 0.0
    %v432 = vadd.f32 %v424, 0.0
    %v433 = vadd.f32 %v425, 0.0
    %v434 = vadd.f32 %v426, 0.0
    %v435 = vadd.f32 %v427, 0.0
    %v436 = vadd.f32 %v428, 0.0
    %v437 = vadd.f32 %v429, 0.0
    %438 = vset.pattern.permute.xlu0 5
    %439 = vperm.xlu0 %438, %v14
    %v440 = vpop.permute.xlu0 %439
    %441 = vset.pattern.permute.xlu0 5
    %442 = vperm.xlu0 %441, %v15
    %v443 = vpop.permute.xlu0 %442
    %444 = vset.pattern.permute.xlu0 5
    %445 = vperm.xlu0 %444, %v16
    %v446 = vpop.permute.xlu0 %445
    %447 = vset.pattern.permute.xlu0 5
    %448 = vperm.xlu0 %447, %v17
    %v449 = vpop.permute.xlu0 %448
    %450 = vset.pattern.permute.xlu0 5
    %451 = vperm.xlu0 %450, %v18
    %v452 = vpop.permute.xlu0 %451
    %453 = vset.pattern.permute.xlu0 5
    %454 = vperm.xlu0 %453, %v19
    %v455 = vpop.permute.xlu0 %454
    %456 = vset.pattern.permute.xlu0 5
    %457 = vperm.xlu0 %456, %v20
    %v458 = vpop.permute.xlu0 %457
    %459 = vset.pattern.permute.xlu0 5
    %460 = vperm.xlu0 %459, %v21
    %v461 = vpop.permute.xlu0 %460
    %vm462 = vcmp.eq.s32.totalorder %v27, %v440
    %vm463 = vcmp.eq.s32.totalorder %v27, %v443
    %vm464 = vcmp.eq.s32.totalorder %v27, %v446
    %vm465 = vcmp.eq.s32.totalorder %v27, %v449
    %vm466 = vcmp.eq.s32.totalorder %v27, %v452
    %vm467 = vcmp.eq.s32.totalorder %v27, %v455
    %vm468 = vcmp.eq.s32.totalorder %v27, %v458
    %vm469 = vcmp.eq.s32.totalorder %v27, %v461
    %v470 = vsel %vm462, 1, 0
    %v471 = vsel %vm463, 1, 0
    %v472 = vsel %vm464, 1, 0
    %v473 = vsel %vm465, 1, 0
    %v474 = vsel %vm466, 1, 0
    %v475 = vsel %vm467, 1, 0
    %v476 = vsel %vm468, 1, 0
    %v477 = vsel %vm469, 1, 0
    %v478 = vcvt.s32.f32 %v470
    %v479 = vcvt.s32.f32 %v471
    %v480 = vcvt.s32.f32 %v472
    %v481 = vcvt.s32.f32 %v473
    %v482 = vcvt.s32.f32 %v474
    %v483 = vcvt.s32.f32 %v475
    %v484 = vcvt.s32.f32 %v476
    %v485 = vcvt.s32.f32 %v477
    %v486 = vadd.f32 %v430, %v478
    %v487 = vadd.f32 %v431, %v479
    %v488 = vadd.f32 %v432, %v480
    %v489 = vadd.f32 %v433, %v481
    %v490 = vadd.f32 %v434, %v482
    %v491 = vadd.f32 %v435, %v483
    %v492 = vadd.f32 %v436, %v484
    %v493 = vadd.f32 %v437, %v485
    %494 = vset.pattern.permute.xlu0 6
    %495 = vperm.xlu0 %494, %v14
    %v496 = vpop.permute.xlu0 %495
    %497 = vset.pattern.permute.xlu0 6
    %498 = vperm.xlu0 %497, %v15
    %v499 = vpop.permute.xlu0 %498
    %500 = vset.pattern.permute.xlu0 6
    %501 = vperm.xlu0 %500, %v16
    %v502 = vpop.permute.xlu0 %501
    %503 = vset.pattern.permute.xlu0 6
    %504 = vperm.xlu0 %503, %v17
    %v505 = vpop.permute.xlu0 %504
    %506 = vset.pattern.permute.xlu0 6
    %507 = vperm.xlu0 %506, %v18
    %v508 = vpop.permute.xlu0 %507
    %509 = vset.pattern.permute.xlu0 6
    %510 = vperm.xlu0 %509, %v19
    %v511 = vpop.permute.xlu0 %510
    %512 = vset.pattern.permute.xlu0 6
    %513 = vperm.xlu0 %512, %v20
    %v514 = vpop.permute.xlu0 %513
    %515 = vset.pattern.permute.xlu0 6
    %516 = vperm.xlu0 %515, %v21
    %v517 = vpop.permute.xlu0 %516
    %vm518 = vcmp.eq.s32.totalorder %v27, %v496
    %vm519 = vcmp.eq.s32.totalorder %v27, %v499
    %vm520 = vcmp.eq.s32.totalorder %v27, %v502
    %vm521 = vcmp.eq.s32.totalorder %v27, %v505
    %vm522 = vcmp.eq.s32.totalorder %v27, %v508
    %vm523 = vcmp.eq.s32.totalorder %v27, %v511
    %vm524 = vcmp.eq.s32.totalorder %v27, %v514
    %vm525 = vcmp.eq.s32.totalorder %v27, %v517
    %v526 = vsel %vm518, 1, 0
    %v527 = vsel %vm519, 1, 0
    %v528 = vsel %vm520, 1, 0
    %v529 = vsel %vm521, 1, 0
    %v530 = vsel %vm522, 1, 0
    %v531 = vsel %vm523, 1, 0
    %v532 = vsel %vm524, 1, 0
    %v533 = vsel %vm525, 1, 0
    %v534 = vcvt.s32.f32 %v526
    %v535 = vcvt.s32.f32 %v527
    %v536 = vcvt.s32.f32 %v528
    %v537 = vcvt.s32.f32 %v529
    %v538 = vcvt.s32.f32 %v530
    %v539 = vcvt.s32.f32 %v531
    %v540 = vcvt.s32.f32 %v532
    %v541 = vcvt.s32.f32 %v533
    %v542 = vadd.f32 %v486, %v534
    %v543 = vadd.f32 %v487, %v535
    %v544 = vadd.f32 %v488, %v536
    %v545 = vadd.f32 %v489, %v537
    %v546 = vadd.f32 %v490, %v538
    %v547 = vadd.f32 %v491, %v539
    %v548 = vadd.f32 %v492, %v540
    %v549 = vadd.f32 %v493, %v541
    %550 = vset.pattern.permute.xlu0 7
    %551 = vperm.xlu0 %550, %v14
    %v552 = vpop.permute.xlu0 %551
    %553 = vset.pattern.permute.xlu0 7
    %554 = vperm.xlu0 %553, %v15
    %v555 = vpop.permute.xlu0 %554
    %556 = vset.pattern.permute.xlu0 7
    %557 = vperm.xlu0 %556, %v16
    %v558 = vpop.permute.xlu0 %557
    %559 = vset.pattern.permute.xlu0 7
    %560 = vperm.xlu0 %559, %v17
    %v561 = vpop.permute.xlu0 %560
    %562 = vset.pattern.permute.xlu0 7
    %563 = vperm.xlu0 %562, %v18
    %v564 = vpop.permute.xlu0 %563
    %565 = vset.pattern.permute.xlu0 7
    %566 = vperm.xlu0 %565, %v19
    %v567 = vpop.permute.xlu0 %566
    %568 = vset.pattern.permute.xlu0 7
    %569 = vperm.xlu0 %568, %v20
    %v570 = vpop.permute.xlu0 %569
    %571 = vset.pattern.permute.xlu0 7
    %572 = vperm.xlu0 %571, %v21
    %v573 = vpop.permute.xlu0 %572
    %vm574 = vcmp.eq.s32.totalorder %v27, %v552
    %vm575 = vcmp.eq.s32.totalorder %v27, %v555
    %vm576 = vcmp.eq.s32.totalorder %v27, %v558
    %vm577 = vcmp.eq.s32.totalorder %v27, %v561
    %vm578 = vcmp.eq.s32.totalorder %v27, %v564
    %vm579 = vcmp.eq.s32.totalorder %v27, %v567
    %vm580 = vcmp.eq.s32.totalorder %v27, %v570
    %vm581 = vcmp.eq.s32.totalorder %v27, %v573
    %v582 = vsel %vm574, 1, 0
    %v583 = vsel %vm575, 1, 0
    %v584 = vsel %vm576, 1, 0
    %v585 = vsel %vm577, 1, 0
    %v586 = vsel %vm578, 1, 0
    %v587 = vsel %vm579, 1, 0
    %v588 = vsel %vm580, 1, 0
    %v589 = vsel %vm581, 1, 0
    %v590 = vcvt.s32.f32 %v582
    %v591 = vcvt.s32.f32 %v583
    %v592 = vcvt.s32.f32 %v584
    %v593 = vcvt.s32.f32 %v585
    %v594 = vcvt.s32.f32 %v586
    %v595 = vcvt.s32.f32 %v587
    %v596 = vcvt.s32.f32 %v588
    %v597 = vcvt.s32.f32 %v589
    %v598 = vadd.f32 %v542, %v590
    %v599 = vadd.f32 %v543, %v591
    %v600 = vadd.f32 %v544, %v592
    %v601 = vadd.f32 %v545, %v593
    %v602 = vadd.f32 %v546, %v594
    %v603 = vadd.f32 %v547, %v595
    %v604 = vadd.f32 %v548, %v596
    %v605 = vadd.f32 %v549, %v597
    %v607 = vsel %vm252, %v598, 0
    %v610 = vsel %vm252, %v599, 0
    %v613 = vsel %vm252, %v600, 0
    %v616 = vsel %vm252, %v601, 0
    %v619 = vsel %vm252, %v602, 0
    %v622 = vsel %vm252, %v603, 0
    %v625 = vsel %vm252, %v604, 0
    %v628 = vsel %vm252, %v605, 0
    %630 = vmatprep.subr.mxu0 0.0
    %631 = vmatpush1.msra.mxu0 %v22
    %632 = vmatprep.subr.mxu0 0.0
    %633 = vmatpush1.msra.mxu0 %v23
    %634 = vmatprep.subr.mxu0 0.0
    %635 = vmatpush1.msra.mxu0 %v24
    %636 = vmatprep.subr.mxu0 0.0
    %637 = vmatpush1.msra.mxu0 %v25
    %638 = vmatprep.subr.mxu0 0.0
    %639 = vmatpush1.msra.mxu0 0.0
    %640 = vmatprep.subr.mxu0 0.0
    %641 = vmatpush1.msra.mxu0 0.0
    %642 = vmatprep.subr.mxu0 0.0
    %643 = vmatpush1.msra.mxu0 0.0
    %644 = vmatprep.subr.mxu0 0.0
    %645 = vmatpush1.msra.mxu0 0.0
    %646 = vmatprep.subr.mxu0 0.0
    %647 = vmatpush1.msra.mxu0 0.0
    %648 = vmatprep.subr.mxu0 0.0
    %649 = vmatpush1.msra.mxu0 0.0
    %650 = vmatprep.subr.mxu0 0.0
    %651 = vmatpush1.msra.mxu0 0.0
    %652 = vmatprep.subr.mxu0 0.0
    %653 = vmatpush1.msra.mxu0 0.0
    %654 = vmatprep.subr.mxu0 0.0
    %655 = vmatpush1.msra.mxu0 0.0
    %656 = vmatprep.subr.mxu0 0.0
    %657 = vmatpush1.msra.mxu0 0.0
    %658 = vmatprep.subr.mxu0 0.0
    %659 = vmatpush1.msra.mxu0 0.0
    %660 = vmatprep.subr.mxu0 0.0
    %661 = vmatpush1.msra.mxu0 0.0
    %662 = vmatprep.subr.mxu0 0.0
    %663 = vmatpush1.msra.mxu0 0.0
    %664 = vmatprep.subr.mxu0 0.0
    %665 = vmatpush1.msra.mxu0 0.0
    %666 = vmatprep.subr.mxu0 0.0
    %667 = vmatpush1.msra.mxu0 0.0
    %668 = vmatprep.subr.mxu0 0.0
    %669 = vmatpush1.msra.mxu0 0.0
    %670 = vmatprep.subr.mxu0 0.0
    %671 = vmatpush1.msra.mxu0 0.0
    %672 = vmatprep.subr.mxu0 0.0
    %673 = vmatpush1.msra.mxu0 0.0
    %674 = vmatprep.subr.mxu0 0.0
    %675 = vmatpush1.msra.mxu0 0.0
    %676 = vmatprep.subr.mxu0 0.0
    %677 = vmatpush1.msra.mxu0 0.0
    %678 = vmatprep.subr.mxu0 0.0
    %679 = vmatpush1.msra.mxu0 0.0
    %680 = vmatprep.subr.mxu0 0.0
    %681 = vmatpush1.msra.mxu0 0.0
    %682 = vmatprep.subr.mxu0 0.0
    %683 = vmatpush1.msra.mxu0 0.0
    %684 = vmatprep.subr.mxu0 0.0
    %685 = vmatpush1.msra.mxu0 0.0
    %686 = vmatprep.subr.mxu0 0.0
    %687 = vmatpush1.msra.mxu0 0.0
    %688 = vmatprep.subr.mxu0 0.0
    %689 = vmatpush1.msra.mxu0 0.0
    %690 = vmatprep.subr.mxu0 0.0
    %691 = vmatpush1.msra.mxu0 0.0
    %692 = vmatprep.subr.mxu0 0.0
    %693 = vmatpush1.msra.mxu0 0.0
    %694 = vmatprep.mubr.f32.mxu0 0.0
    %695 = vmatmul.mubr.f32.gmra.mrb[0].mxu0 %v607
    %v696 = vpop.f32.mrb[0].mxu0
    %v697 = vadd.f32 0.0, %v696
    %v698 = vpop.f32.mrb[0].mxu0
    %699 = vmatprep.mubr.f32.mxu0 0.0
    %700 = vmatmul.mubr.f32.gmra.mrb[0].mxu0 %v610
    %v701 = vpop.f32.mrb[0].mxu0
    %v702 = vadd.f32 0.0, %v701
    %v703 = vpop.f32.mrb[0].mxu0
    %704 = vmatprep.mubr.f32.mxu0 0.0
    %705 = vmatmul.mubr.f32.gmra.mrb[0].mxu0 %v613
    %v706 = vpop.f32.mrb[0].mxu0
    %v707 = vadd.f32 0.0, %v706
    %v708 = vpop.f32.mrb[0].mxu0
    %709 = vmatprep.mubr.f32.mxu0 0.0
    %710 = vmatmul.mubr.f32.gmra.mrb[0].mxu0 %v616
    %v711 = vpop.f32.mrb[0].mxu0
    %v712 = vadd.f32 0.0, %v711
    %v713 = vpop.f32.mrb[0].mxu0
    %714 = vmatprep.mubr.f32.mxu0 0.0
    %715 = vmatmul.mubr.f32.gmra.mrb[0].mxu0 %v619
    %v716 = vpop.f32.mrb[0].mxu0
    %v717 = vadd.f32 0.0, %v716
    %v718 = vpop.f32.mrb[0].mxu0
    %719 = vmatprep.mubr.f32.mxu0 0.0
    %720 = vmatmul.mubr.f32.gmra.mrb[0].mxu0 %v622
    %v721 = vpop.f32.mrb[0].mxu0
    %v722 = vadd.f32 0.0, %v721
    %v723 = vpop.f32.mrb[0].mxu0
    %724 = vmatprep.mubr.f32.mxu0 0.0
    %725 = vmatmul.mubr.f32.gmra.mrb[0].mxu0 %v625
    %v726 = vpop.f32.mrb[0].mxu0
    %v727 = vadd.f32 0.0, %v726
    %v728 = vpop.f32.mrb[0].mxu0
    %729 = vmatprep.mubr.f32.mxu0 0.0
    %730 = vmatmul.mubr.f32.gmra.mrb[0].mxu0 %v628
    %v731 = vpop.f32.mrb[0].mxu0
    %v732 = vadd.f32 0.0, %v731
    %v733 = vpop.f32.mrb[0].mxu0
    %734 = vdwg.mxu0
    %735 = vset.pattern.permute.xlu0 8
    %736 = vperm.xlu0 %735, %v14
    %v737 = vpop.permute.xlu0 %736
    %738 = vset.pattern.permute.xlu0 8
    %739 = vperm.xlu0 %738, %v15
    %v740 = vpop.permute.xlu0 %739
    %741 = vset.pattern.permute.xlu0 8
    %742 = vperm.xlu0 %741, %v16
    %v743 = vpop.permute.xlu0 %742
    %744 = vset.pattern.permute.xlu0 8
    %745 = vperm.xlu0 %744, %v17
    %v746 = vpop.permute.xlu0 %745
    %747 = vset.pattern.permute.xlu0 8
    %748 = vperm.xlu0 %747, %v18
    %v749 = vpop.permute.xlu0 %748
    %750 = vset.pattern.permute.xlu0 8
    %751 = vperm.xlu0 %750, %v19
    %v752 = vpop.permute.xlu0 %751
    %753 = vset.pattern.permute.xlu0 8
    %754 = vperm.xlu0 %753, %v20
    %v755 = vpop.permute.xlu0 %754
    %756 = vset.pattern.permute.xlu0 8
    %757 = vperm.xlu0 %756, %v21
    %v758 = vpop.permute.xlu0 %757
    %vm759 = vcmp.eq.s32.totalorder %v27, %v737
    %vm760 = vcmp.eq.s32.totalorder %v27, %v740
    %vm761 = vcmp.eq.s32.totalorder %v27, %v743
    %vm762 = vcmp.eq.s32.totalorder %v27, %v746
    %vm763 = vcmp.eq.s32.totalorder %v27, %v749
    %vm764 = vcmp.eq.s32.totalorder %v27, %v752
    %vm765 = vcmp.eq.s32.totalorder %v27, %v755
    %vm766 = vcmp.eq.s32.totalorder %v27, %v758
    %v767 = vsel %vm759, 1, 0
    %v768 = vsel %vm760, 1, 0
    %v769 = vsel %vm761, 1, 0
    %v770 = vsel %vm762, 1, 0
    %v771 = vsel %vm763, 1, 0
    %v772 = vsel %vm764, 1, 0
    %v773 = vsel %vm765, 1, 0
    %v774 = vsel %vm766, 1, 0
    %v775 = vcvt.s32.f32 %v767
    %v776 = vcvt.s32.f32 %v768
    %v777 = vcvt.s32.f32 %v769
    %v778 = vcvt.s32.f32 %v770
    %v779 = vcvt.s32.f32 %v771
    %v780 = vcvt.s32.f32 %v772
    %v781 = vcvt.s32.f32 %v773
    %v782 = vcvt.s32.f32 %v774
    %v783 = vadd.f32 %v775, 0.0
    %v784 = vadd.f32 %v776, 0.0
    %v785 = vadd.f32 %v777, 0.0
    %v786 = vadd.f32 %v778, 0.0
    %v787 = vadd.f32 %v779, 0.0
    %v788 = vadd.f32 %v780, 0.0
    %v789 = vadd.f32 %v781, 0.0
    %v790 = vadd.f32 %v782, 0.0
    %791 = vset.pattern.permute.xlu0 9
    %792 = vperm.xlu0 %791, %v14
    %v793 = vpop.permute.xlu0 %792
    %794 = vset.pattern.permute.xlu0 9
    %795 = vperm.xlu0 %794, %v15
    %v796 = vpop.permute.xlu0 %795
    %797 = vset.pattern.permute.xlu0 9
    %798 = vperm.xlu0 %797, %v16
    %v799 = vpop.permute.xlu0 %798
    %800 = vset.pattern.permute.xlu0 9
    %801 = vperm.xlu0 %800, %v17
    %v802 = vpop.permute.xlu0 %801
    %803 = vset.pattern.permute.xlu0 9
    %804 = vperm.xlu0 %803, %v18
    %v805 = vpop.permute.xlu0 %804
    %806 = vset.pattern.permute.xlu0 9
    %807 = vperm.xlu0 %806, %v19
    %v808 = vpop.permute.xlu0 %807
    %809 = vset.pattern.permute.xlu0 9
    %810 = vperm.xlu0 %809, %v20
    %v811 = vpop.permute.xlu0 %810
    %812 = vset.pattern.permute.xlu0 9
    %813 = vperm.xlu0 %812, %v21
    %v814 = vpop.permute.xlu0 %813
    %vm815 = vcmp.eq.s32.totalorder %v27, %v793
    %vm816 = vcmp.eq.s32.totalorder %v27, %v796
    %vm817 = vcmp.eq.s32.totalorder %v27, %v799
    %vm818 = vcmp.eq.s32.totalorder %v27, %v802
    %vm819 = vcmp.eq.s32.totalorder %v27, %v805
    %vm820 = vcmp.eq.s32.totalorder %v27, %v808
    %vm821 = vcmp.eq.s32.totalorder %v27, %v811
    %vm822 = vcmp.eq.s32.totalorder %v27, %v814
    %v823 = vsel %vm815, 1, 0
    %v824 = vsel %vm816, 1, 0
    %v825 = vsel %vm817, 1, 0
    %v826 = vsel %vm818, 1, 0
    %v827 = vsel %vm819, 1, 0
    %v828 = vsel %vm820, 1, 0
    %v829 = vsel %vm821, 1, 0
    %v830 = vsel %vm822, 1, 0
    %v831 = vcvt.s32.f32 %v823
    %v832 = vcvt.s32.f32 %v824
    %v833 = vcvt.s32.f32 %v825
    %v834 = vcvt.s32.f32 %v826
    %v835 = vcvt.s32.f32 %v827
    %v836 = vcvt.s32.f32 %v828
    %v837 = vcvt.s32.f32 %v829
    %v838 = vcvt.s32.f32 %v830
    %v839 = vadd.f32 %v783, %v831
    %v840 = vadd.f32 %v784, %v832
    %v841 = vadd.f32 %v785, %v833
    %v842 = vadd.f32 %v786, %v834
    %v843 = vadd.f32 %v787, %v835
    %v844 = vadd.f32 %v788, %v836
    %v845 = vadd.f32 %v789, %v837
    %v846 = vadd.f32 %v790, %v838
    %847 = vset.pattern.permute.xlu0 10
    %848 = vperm.xlu0 %847, %v14
    %v849 = vpop.permute.xlu0 %848
    %850 = vset.pattern.permute.xlu0 10
    %851 = vperm.xlu0 %850, %v15
    %v852 = vpop.permute.xlu0 %851
    %853 = vset.pattern.permute.xlu0 10
    %854 = vperm.xlu0 %853, %v16
    %v855 = vpop.permute.xlu0 %854
    %856 = vset.pattern.permute.xlu0 10
    %857 = vperm.xlu0 %856, %v17
    %v858 = vpop.permute.xlu0 %857
    %859 = vset.pattern.permute.xlu0 10
    %860 = vperm.xlu0 %859, %v18
    %v861 = vpop.permute.xlu0 %860
    %862 = vset.pattern.permute.xlu0 10
    %863 = vperm.xlu0 %862, %v19
    %v864 = vpop.permute.xlu0 %863
    %865 = vset.pattern.permute.xlu0 10
    %866 = vperm.xlu0 %865, %v20
    %v867 = vpop.permute.xlu0 %866
    %868 = vset.pattern.permute.xlu0 10
    %869 = vperm.xlu0 %868, %v21
    %v870 = vpop.permute.xlu0 %869
    %vm871 = vcmp.eq.s32.totalorder %v27, %v849
    %vm872 = vcmp.eq.s32.totalorder %v27, %v852
    %vm873 = vcmp.eq.s32.totalorder %v27, %v855
    %vm874 = vcmp.eq.s32.totalorder %v27, %v858
    %vm875 = vcmp.eq.s32.totalorder %v27, %v861
    %vm876 = vcmp.eq.s32.totalorder %v27, %v864
    %vm877 = vcmp.eq.s32.totalorder %v27, %v867
    %vm878 = vcmp.eq.s32.totalorder %v27, %v870
    %v879 = vsel %vm871, 1, 0
    %v880 = vsel %vm872, 1, 0
    %v881 = vsel %vm873, 1, 0
    %v882 = vsel %vm874, 1, 0
    %v883 = vsel %vm875, 1, 0
    %v884 = vsel %vm876, 1, 0
    %v885 = vsel %vm877, 1, 0
    %v886 = vsel %vm878, 1, 0
    %v887 = vcvt.s32.f32 %v879
    %v888 = vcvt.s32.f32 %v880
    %v889 = vcvt.s32.f32 %v881
    %v890 = vcvt.s32.f32 %v882
    %v891 = vcvt.s32.f32 %v883
    %v892 = vcvt.s32.f32 %v884
    %v893 = vcvt.s32.f32 %v885
    %v894 = vcvt.s32.f32 %v886
    %v895 = vadd.f32 %v839, %v887
    %v896 = vadd.f32 %v840, %v888
    %v897 = vadd.f32 %v841, %v889
    %v898 = vadd.f32 %v842, %v890
    %v899 = vadd.f32 %v843, %v891
    %v900 = vadd.f32 %v844, %v892
    %v901 = vadd.f32 %v845, %v893
    %v902 = vadd.f32 %v846, %v894
    %903 = vset.pattern.permute.xlu0 11
    %904 = vperm.xlu0 %903, %v14
    %v905 = vpop.permute.xlu0 %904
    %906 = vset.pattern.permute.xlu0 11
    %907 = vperm.xlu0 %906, %v15
    %v908 = vpop.permute.xlu0 %907
    %909 = vset.pattern.permute.xlu0 11
    %910 = vperm.xlu0 %909, %v16
    %v911 = vpop.permute.xlu0 %910
    %912 = vset.pattern.permute.xlu0 11
    %913 = vperm.xlu0 %912, %v17
    %v914 = vpop.permute.xlu0 %913
    %915 = vset.pattern.permute.xlu0 11
    %916 = vperm.xlu0 %915, %v18
    %v917 = vpop.permute.xlu0 %916
    %918 = vset.pattern.permute.xlu0 11
    %919 = vperm.xlu0 %918, %v19
    %v920 = vpop.permute.xlu0 %919
    %921 = vset.pattern.permute.xlu0 11
    %922 = vperm.xlu0 %921, %v20
    %v923 = vpop.permute.xlu0 %922
    %924 = vset.pattern.permute.xlu0 11
    %925 = vperm.xlu0 %924, %v21
    %v926 = vpop.permute.xlu0 %925
    %vm927 = vcmp.eq.s32.totalorder %v27, %v905
    %vm928 = vcmp.eq.s32.totalorder %v27, %v908
    %vm929 = vcmp.eq.s32.totalorder %v27, %v911
    %vm930 = vcmp.eq.s32.totalorder %v27, %v914
    %vm931 = vcmp.eq.s32.totalorder %v27, %v917
    %vm932 = vcmp.eq.s32.totalorder %v27, %v920
    %vm933 = vcmp.eq.s32.totalorder %v27, %v923
    %vm934 = vcmp.eq.s32.totalorder %v27, %v926
    %v935 = vsel %vm927, 1, 0
    %v936 = vsel %vm928, 1, 0
    %v937 = vsel %vm929, 1, 0
    %v938 = vsel %vm930, 1, 0
    %v939 = vsel %vm931, 1, 0
    %v940 = vsel %vm932, 1, 0
    %v941 = vsel %vm933, 1, 0
    %v942 = vsel %vm934, 1, 0
    %v943 = vcvt.s32.f32 %v935
    %v944 = vcvt.s32.f32 %v936
    %v945 = vcvt.s32.f32 %v937
    %v946 = vcvt.s32.f32 %v938
    %v947 = vcvt.s32.f32 %v939
    %v948 = vcvt.s32.f32 %v940
    %v949 = vcvt.s32.f32 %v941
    %v950 = vcvt.s32.f32 %v942
    %v951 = vadd.f32 %v895, %v943
    %v952 = vadd.f32 %v896, %v944
    %v953 = vadd.f32 %v897, %v945
    %v954 = vadd.f32 %v898, %v946
    %v955 = vadd.f32 %v899, %v947
    %v956 = vadd.f32 %v900, %v948
    %v957 = vadd.f32 %v901, %v949
    %v958 = vadd.f32 %v902, %v950
    %v960 = vsel %vm252, %v951, 0
    %v963 = vsel %vm252, %v952, 0
    %v966 = vsel %vm252, %v953, 0
    %v969 = vsel %vm252, %v954, 0
    %v972 = vsel %vm252, %v955, 0
    %v975 = vsel %vm252, %v956, 0
    %v978 = vsel %vm252, %v957, 0
    %v981 = vsel %vm252, %v958, 0
    %983 = vmatprep.subr.mxu0 0.0
    %984 = vmatpush1.msra.mxu0 %v22
    %985 = vmatprep.subr.mxu0 0.0
    %986 = vmatpush1.msra.mxu0 %v23
    %987 = vmatprep.subr.mxu0 0.0
    %988 = vmatpush1.msra.mxu0 %v24
    %989 = vmatprep.subr.mxu0 0.0
    %990 = vmatpush1.msra.mxu0 %v25
    %991 = vmatprep.subr.mxu0 0.0
    %992 = vmatpush1.msra.mxu0 0.0
    %993 = vmatprep.subr.mxu0 0.0
    %994 = vmatpush1.msra.mxu0 0.0
    %995 = vmatprep.subr.mxu0 0.0
    %996 = vmatpush1.msra.mxu0 0.0
    %997 = vmatprep.subr.mxu0 0.0
    %998 = vmatpush1.msra.mxu0 0.0
    %999 = vmatprep.subr.mxu0 0.0
    %1000 = vmatpush1.msra.mxu0 0.0
    %1001 = vmatprep.subr.mxu0 0.0
    %1002 = vmatpush1.msra.mxu0 0.0
    %1003 = vmatprep.subr.mxu0 0.0
    %1004 = vmatpush1.msra.mxu0 0.0
    %1005 = vmatprep.subr.mxu0 0.0
    %1006 = vmatpush1.msra.mxu0 0.0
    %1007 = vmatprep.subr.mxu0 0.0
    %1008 = vmatpush1.msra.mxu0 0.0
    %1009 = vmatprep.subr.mxu0 0.0
    %1010 = vmatpush1.msra.mxu0 0.0
    %1011 = vmatprep.subr.mxu0 0.0
    %1012 = vmatpush1.msra.mxu0 0.0
    %1013 = vmatprep.subr.mxu0 0.0
    %1014 = vmatpush1.msra.mxu0 0.0
    %1015 = vmatprep.subr.mxu0 0.0
    %1016 = vmatpush1.msra.mxu0 0.0
    %1017 = vmatprep.subr.mxu0 0.0
    %1018 = vmatpush1.msra.mxu0 0.0
    %1019 = vmatprep.subr.mxu0 0.0
    %1020 = vmatpush1.msra.mxu0 0.0
    %1021 = vmatprep.subr.mxu0 0.0
    %1022 = vmatpush1.msra.mxu0 0.0
    %1023 = vmatprep.subr.mxu0 0.0
    %1024 = vmatpush1.msra.mxu0 0.0
    %1025 = vmatprep.subr.mxu0 0.0
    %1026 = vmatpush1.msra.mxu0 0.0
    %1027 = vmatprep.subr.mxu0 0.0
    %1028 = vmatpush1.msra.mxu0 0.0
    %1029 = vmatprep.subr.mxu0 0.0
    %1030 = vmatpush1.msra.mxu0 0.0
    %1031 = vmatprep.subr.mxu0 0.0
    %1032 = vmatpush1.msra.mxu0 0.0
    %1033 = vmatprep.subr.mxu0 0.0
    %1034 = vmatpush1.msra.mxu0 0.0
    %1035 = vmatprep.subr.mxu0 0.0
    %1036 = vmatpush1.msra.mxu0 0.0
    %1037 = vmatprep.subr.mxu0 0.0
    %1038 = vmatpush1.msra.mxu0 0.0
    %1039 = vmatprep.subr.mxu0 0.0
    %1040 = vmatpush1.msra.mxu0 0.0
    %1041 = vmatprep.subr.mxu0 0.0
    %1042 = vmatpush1.msra.mxu0 0.0
    %1043 = vmatprep.subr.mxu0 0.0
    %1044 = vmatpush1.msra.mxu0 0.0
    %1045 = vmatprep.subr.mxu0 0.0
    %1046 = vmatpush1.msra.mxu0 0.0
    %1047 = vmatprep.mubr.f32.mxu0 0.0
    %1048 = vmatmul.mubr.f32.gmra.mrb[0].mxu0 %v960
    %v1049 = vpop.f32.mrb[0].mxu0
    %v1050 = vadd.f32 0.0, %v1049
    %v1051 = vpop.f32.mrb[0].mxu0
    %1052 = vmatprep.mubr.f32.mxu0 0.0
    %1053 = vmatmul.mubr.f32.gmra.mrb[0].mxu0 %v963
    %v1054 = vpop.f32.mrb[0].mxu0
    %v1055 = vadd.f32 0.0, %v1054
    %v1056 = vpop.f32.mrb[0].mxu0
    %1057 = vmatprep.mubr.f32.mxu0 0.0
    %1058 = vmatmul.mubr.f32.gmra.mrb[0].mxu0 %v966
    %v1059 = vpop.f32.mrb[0].mxu0
    %v1060 = vadd.f32 0.0, %v1059
    %v1061 = vpop.f32.mrb[0].mxu0
    %1062 = vmatprep.mubr.f32.mxu0 0.0
    %1063 = vmatmul.mubr.f32.gmra.mrb[0].mxu0 %v969
    %v1064 = vpop.f32.mrb[0].mxu0
    %v1065 = vadd.f32 0.0, %v1064
    %v1066 = vpop.f32.mrb[0].mxu0
    %1067 = vmatprep.mubr.f32.mxu0 0.0
    %1068 = vmatmul.mubr.f32.gmra.mrb[0].mxu0 %v972
    %v1069 = vpop.f32.mrb[0].mxu0
    %v1070 = vadd.f32 0.0, %v1069
    %v1071 = vpop.f32.mrb[0].mxu0
    %1072 = vmatprep.mubr.f32.mxu0 0.0
    %1073 = vmatmul.mubr.f32.gmra.mrb[0].mxu0 %v975
    %v1074 = vpop.f32.mrb[0].mxu0
    %v1075 = vadd.f32 0.0, %v1074
    %v1076 = vpop.f32.mrb[0].mxu0
    %1077 = vmatprep.mubr.f32.mxu0 0.0
    %1078 = vmatmul.mubr.f32.gmra.mrb[0].mxu0 %v978
    %v1079 = vpop.f32.mrb[0].mxu0
    %v1080 = vadd.f32 0.0, %v1079
    %v1081 = vpop.f32.mrb[0].mxu0
    %1082 = vmatprep.mubr.f32.mxu0 0.0
    %1083 = vmatmul.mubr.f32.gmra.mrb[0].mxu0 %v981
    %v1084 = vpop.f32.mrb[0].mxu0
    %v1085 = vadd.f32 0.0, %v1084
    %v1086 = vpop.f32.mrb[0].mxu0
    %1087 = vdwg.mxu0
    %1088 = vset.pattern.permute.xlu0 12
    %1089 = vperm.xlu0 %1088, %v14
    %v1090 = vpop.permute.xlu0 %1089
    %1091 = vset.pattern.permute.xlu0 12
    %1092 = vperm.xlu0 %1091, %v15
    %v1093 = vpop.permute.xlu0 %1092
    %1094 = vset.pattern.permute.xlu0 12
    %1095 = vperm.xlu0 %1094, %v16
    %v1096 = vpop.permute.xlu0 %1095
    %1097 = vset.pattern.permute.xlu0 12
    %1098 = vperm.xlu0 %1097, %v17
    %v1099 = vpop.permute.xlu0 %1098
    %1100 = vset.pattern.permute.xlu0 12
    %1101 = vperm.xlu0 %1100, %v18
    %v1102 = vpop.permute.xlu0 %1101
    %1103 = vset.pattern.permute.xlu0 12
    %1104 = vperm.xlu0 %1103, %v19
    %v1105 = vpop.permute.xlu0 %1104
    %1106 = vset.pattern.permute.xlu0 12
    %1107 = vperm.xlu0 %1106, %v20
    %v1108 = vpop.permute.xlu0 %1107
    %1109 = vset.pattern.permute.xlu0 12
    %1110 = vperm.xlu0 %1109, %v21
    %v1111 = vpop.permute.xlu0 %1110
    %vm1112 = vcmp.eq.s32.totalorder %v27, %v1090
    %vm1113 = vcmp.eq.s32.totalorder %v27, %v1093
    %vm1114 = vcmp.eq.s32.totalorder %v27, %v1096
    %vm1115 = vcmp.eq.s32.totalorder %v27, %v1099
    %vm1116 = vcmp.eq.s32.totalorder %v27, %v1102
    %vm1117 = vcmp.eq.s32.totalorder %v27, %v1105
    %vm1118 = vcmp.eq.s32.totalorder %v27, %v1108
    %vm1119 = vcmp.eq.s32.totalorder %v27, %v1111
    %v1120 = vsel %vm1112, 1, 0
    %v1121 = vsel %vm1113, 1, 0
    %v1122 = vsel %vm1114, 1, 0
    %v1123 = vsel %vm1115, 1, 0
    %v1124 = vsel %vm1116, 1, 0
    %v1125 = vsel %vm1117, 1, 0
    %v1126 = vsel %vm1118, 1, 0
    %v1127 = vsel %vm1119, 1, 0
    %v1128 = vcvt.s32.f32 %v1120
    %v1129 = vcvt.s32.f32 %v1121
    %v1130 = vcvt.s32.f32 %v1122
    %v1131 = vcvt.s32.f32 %v1123
    %v1132 = vcvt.s32.f32 %v1124
    %v1133 = vcvt.s32.f32 %v1125
    %v1134 = vcvt.s32.f32 %v1126
    %v1135 = vcvt.s32.f32 %v1127
    %v1136 = vadd.f32 %v1128, 0.0
    %v1137 = vadd.f32 %v1129, 0.0
    %v1138 = vadd.f32 %v1130, 0.0
    %v1139 = vadd.f32 %v1131, 0.0
    %v1140 = vadd.f32 %v1132, 0.0
    %v1141 = vadd.f32 %v1133, 0.0
    %v1142 = vadd.f32 %v1134, 0.0
    %v1143 = vadd.f32 %v1135, 0.0
    %1144 = vset.pattern.permute.xlu0 13
    %1145 = vperm.xlu0 %1144, %v14
    %v1146 = vpop.permute.xlu0 %1145
    %1147 = vset.pattern.permute.xlu0 13
    %1148 = vperm.xlu0 %1147, %v15
    %v1149 = vpop.permute.xlu0 %1148
    %1150 = vset.pattern.permute.xlu0 13
    %1151 = vperm.xlu0 %1150, %v16
    %v1152 = vpop.permute.xlu0 %1151
    %1153 = vset.pattern.permute.xlu0 13
    %1154 = vperm.xlu0 %1153, %v17
    %v1155 = vpop.permute.xlu0 %1154
    %1156 = vset.pattern.permute.xlu0 13
    %1157 = vperm.xlu0 %1156, %v18
    %v1158 = vpop.permute.xlu0 %1157
    %1159 = vset.pattern.permute.xlu0 13
    %1160 = vperm.xlu0 %1159, %v19
    %v1161 = vpop.permute.xlu0 %1160
    %1162 = vset.pattern.permute.xlu0 13
    %1163 = vperm.xlu0 %1162, %v20
    %v1164 = vpop.permute.xlu0 %1163
    %1165 = vset.pattern.permute.xlu0 13
    %1166 = vperm.xlu0 %1165, %v21
    %v1167 = vpop.permute.xlu0 %1166
    %vm1168 = vcmp.eq.s32.totalorder %v27, %v1146
    %vm1169 = vcmp.eq.s32.totalorder %v27, %v1149
    %vm1170 = vcmp.eq.s32.totalorder %v27, %v1152
    %vm1171 = vcmp.eq.s32.totalorder %v27, %v1155
    %vm1172 = vcmp.eq.s32.totalorder %v27, %v1158
    %vm1173 = vcmp.eq.s32.totalorder %v27, %v1161
    %vm1174 = vcmp.eq.s32.totalorder %v27, %v1164
    %vm1175 = vcmp.eq.s32.totalorder %v27, %v1167
    %v1176 = vsel %vm1168, 1, 0
    %v1177 = vsel %vm1169, 1, 0
    %v1178 = vsel %vm1170, 1, 0
    %v1179 = vsel %vm1171, 1, 0
    %v1180 = vsel %vm1172, 1, 0
    %v1181 = vsel %vm1173, 1, 0
    %v1182 = vsel %vm1174, 1, 0
    %v1183 = vsel %vm1175, 1, 0
    %v1184 = vcvt.s32.f32 %v1176
    %v1185 = vcvt.s32.f32 %v1177
    %v1186 = vcvt.s32.f32 %v1178
    %v1187 = vcvt.s32.f32 %v1179
    %v1188 = vcvt.s32.f32 %v1180
    %v1189 = vcvt.s32.f32 %v1181
    %v1190 = vcvt.s32.f32 %v1182
    %v1191 = vcvt.s32.f32 %v1183
    %v1192 = vadd.f32 %v1136, %v1184
    %v1193 = vadd.f32 %v1137, %v1185
    %v1194 = vadd.f32 %v1138, %v1186
    %v1195 = vadd.f32 %v1139, %v1187
    %v1196 = vadd.f32 %v1140, %v1188
    %v1197 = vadd.f32 %v1141, %v1189
    %v1198 = vadd.f32 %v1142, %v1190
    %v1199 = vadd.f32 %v1143, %v1191
    %1200 = vset.pattern.permute.xlu0 14
    %1201 = vperm.xlu0 %1200, %v14
    %v1202 = vpop.permute.xlu0 %1201
    %1203 = vset.pattern.permute.xlu0 14
    %1204 = vperm.xlu0 %1203, %v15
    %v1205 = vpop.permute.xlu0 %1204
    %1206 = vset.pattern.permute.xlu0 14
    %1207 = vperm.xlu0 %1206, %v16
    %v1208 = vpop.permute.xlu0 %1207
    %1209 = vset.pattern.permute.xlu0 14
    %1210 = vperm.xlu0 %1209, %v17
    %v1211 = vpop.permute.xlu0 %1210
    %1212 = vset.pattern.permute.xlu0 14
    %1213 = vperm.xlu0 %1212, %v18
    %v1214 = vpop.permute.xlu0 %1213
    %1215 = vset.pattern.permute.xlu0 14
    %1216 = vperm.xlu0 %1215, %v19
    %v1217 = vpop.permute.xlu0 %1216
    %1218 = vset.pattern.permute.xlu0 14
    %1219 = vperm.xlu0 %1218, %v20
    %v1220 = vpop.permute.xlu0 %1219
    %1221 = vset.pattern.permute.xlu0 14
    %1222 = vperm.xlu0 %1221, %v21
    %v1223 = vpop.permute.xlu0 %1222
    %vm1224 = vcmp.eq.s32.totalorder %v27, %v1202
    %vm1225 = vcmp.eq.s32.totalorder %v27, %v1205
    %vm1226 = vcmp.eq.s32.totalorder %v27, %v1208
    %vm1227 = vcmp.eq.s32.totalorder %v27, %v1211
    %vm1228 = vcmp.eq.s32.totalorder %v27, %v1214
    %vm1229 = vcmp.eq.s32.totalorder %v27, %v1217
    %vm1230 = vcmp.eq.s32.totalorder %v27, %v1220
    %vm1231 = vcmp.eq.s32.totalorder %v27, %v1223
    %v1232 = vsel %vm1224, 1, 0
    %v1233 = vsel %vm1225, 1, 0
    %v1234 = vsel %vm1226, 1, 0
    %v1235 = vsel %vm1227, 1, 0
    %v1236 = vsel %vm1228, 1, 0
    %v1237 = vsel %vm1229, 1, 0
    %v1238 = vsel %vm1230, 1, 0
    %v1239 = vsel %vm1231, 1, 0
    %v1240 = vcvt.s32.f32 %v1232
    %v1241 = vcvt.s32.f32 %v1233
    %v1242 = vcvt.s32.f32 %v1234
    %v1243 = vcvt.s32.f32 %v1235
    %v1244 = vcvt.s32.f32 %v1236
    %v1245 = vcvt.s32.f32 %v1237
    %v1246 = vcvt.s32.f32 %v1238
    %v1247 = vcvt.s32.f32 %v1239
    %v1248 = vadd.f32 %v1192, %v1240
    %v1249 = vadd.f32 %v1193, %v1241
    %v1250 = vadd.f32 %v1194, %v1242
    %v1251 = vadd.f32 %v1195, %v1243
    %v1252 = vadd.f32 %v1196, %v1244
    %v1253 = vadd.f32 %v1197, %v1245
    %v1254 = vadd.f32 %v1198, %v1246
    %v1255 = vadd.f32 %v1199, %v1247
    %1256 = vset.pattern.permute.xlu0 15
    %1257 = vperm.xlu0 %1256, %v14
    %v1258 = vpop.permute.xlu0 %1257
    %1259 = vset.pattern.permute.xlu0 15
    %1260 = vperm.xlu0 %1259, %v15
    %v1261 = vpop.permute.xlu0 %1260
    %1262 = vset.pattern.permute.xlu0 15
    %1263 = vperm.xlu0 %1262, %v16
    %v1264 = vpop.permute.xlu0 %1263
    %1265 = vset.pattern.permute.xlu0 15
    %1266 = vperm.xlu0 %1265, %v17
    %v1267 = vpop.permute.xlu0 %1266
    %1268 = vset.pattern.permute.xlu0 15
    %1269 = vperm.xlu0 %1268, %v18
    %v1270 = vpop.permute.xlu0 %1269
    %1271 = vset.pattern.permute.xlu0 15
    %1272 = vperm.xlu0 %1271, %v19
    %v1273 = vpop.permute.xlu0 %1272
    %1274 = vset.pattern.permute.xlu0 15
    %1275 = vperm.xlu0 %1274, %v20
    %v1276 = vpop.permute.xlu0 %1275
    %1277 = vset.pattern.permute.xlu0 15
    %1278 = vperm.xlu0 %1277, %v21
    %v1279 = vpop.permute.xlu0 %1278
    %vm1280 = vcmp.eq.s32.totalorder %v27, %v1258
    %vm1281 = vcmp.eq.s32.totalorder %v27, %v1261
    %vm1282 = vcmp.eq.s32.totalorder %v27, %v1264
    %vm1283 = vcmp.eq.s32.totalorder %v27, %v1267
    %vm1284 = vcmp.eq.s32.totalorder %v27, %v1270
    %vm1285 = vcmp.eq.s32.totalorder %v27, %v1273
    %vm1286 = vcmp.eq.s32.totalorder %v27, %v1276
    %vm1287 = vcmp.eq.s32.totalorder %v27, %v1279
    %v1288 = vsel %vm1280, 1, 0
    %v1289 = vsel %vm1281, 1, 0
    %v1290 = vsel %vm1282, 1, 0
    %v1291 = vsel %vm1283, 1, 0
    %v1292 = vsel %vm1284, 1, 0
    %v1293 = vsel %vm1285, 1, 0
    %v1294 = vsel %vm1286, 1, 0
    %v1295 = vsel %vm1287, 1, 0
    %v1296 = vcvt.s32.f32 %v1288
    %v1297 = vcvt.s32.f32 %v1289
    %v1298 = vcvt.s32.f32 %v1290
    %v1299 = vcvt.s32.f32 %v1291
    %v1300 = vcvt.s32.f32 %v1292
    %v1301 = vcvt.s32.f32 %v1293
    %v1302 = vcvt.s32.f32 %v1294
    %v1303 = vcvt.s32.f32 %v1295
    %v1304 = vadd.f32 %v1248, %v1296
    %v1305 = vadd.f32 %v1249, %v1297
    %v1306 = vadd.f32 %v1250, %v1298
    %v1307 = vadd.f32 %v1251, %v1299
    %v1308 = vadd.f32 %v1252, %v1300
    %v1309 = vadd.f32 %v1253, %v1301
    %v1310 = vadd.f32 %v1254, %v1302
    %v1311 = vadd.f32 %v1255, %v1303
    %v1313 = vsel %vm252, %v1304, 0
    %v1316 = vsel %vm252, %v1305, 0
    %v1319 = vsel %vm252, %v1306, 0
    %v1322 = vsel %vm252, %v1307, 0
    %v1325 = vsel %vm252, %v1308, 0
    %v1328 = vsel %vm252, %v1309, 0
    %v1331 = vsel %vm252, %v1310, 0
    %v1334 = vsel %vm252, %v1311, 0
    %1336 = vmatprep.subr.mxu0 0.0
    %1337 = vmatpush1.msra.mxu0 %v22
    %1338 = vmatprep.subr.mxu0 0.0
    %1339 = vmatpush1.msra.mxu0 %v23
    %1340 = vmatprep.subr.mxu0 0.0
    %1341 = vmatpush1.msra.mxu0 %v24
    %1342 = vmatprep.subr.mxu0 0.0
    %1343 = vmatpush1.msra.mxu0 %v25
    %1344 = vmatprep.subr.mxu0 0.0
    %1345 = vmatpush1.msra.mxu0 0.0
    %1346 = vmatprep.subr.mxu0 0.0
    %1347 = vmatpush1.msra.mxu0 0.0
    %1348 = vmatprep.subr.mxu0 0.0
    %1349 = vmatpush1.msra.mxu0 0.0
    %1350 = vmatprep.subr.mxu0 0.0
    %1351 = vmatpush1.msra.mxu0 0.0
    %1352 = vmatprep.subr.mxu0 0.0
    %1353 = vmatpush1.msra.mxu0 0.0
    %1354 = vmatprep.subr.mxu0 0.0
    %1355 = vmatpush1.msra.mxu0 0.0
    %1356 = vmatprep.subr.mxu0 0.0
    %1357 = vmatpush1.msra.mxu0 0.0
    %1358 = vmatprep.subr.mxu0 0.0
    %1359 = vmatpush1.msra.mxu0 0.0
    %1360 = vmatprep.subr.mxu0 0.0
    %1361 = vmatpush1.msra.mxu0 0.0
    %1362 = vmatprep.subr.mxu0 0.0
    %1363 = vmatpush1.msra.mxu0 0.0
    %1364 = vmatprep.subr.mxu0 0.0
    %1365 = vmatpush1.msra.mxu0 0.0
    %1366 = vmatprep.subr.mxu0 0.0
    %1367 = vmatpush1.msra.mxu0 0.0
    %1368 = vmatprep.subr.mxu0 0.0
    %1369 = vmatpush1.msra.mxu0 0.0
    %1370 = vmatprep.subr.mxu0 0.0
    %1371 = vmatpush1.msra.mxu0 0.0
    %1372 = vmatprep.subr.mxu0 0.0
    %1373 = vmatpush1.msra.mxu0 0.0
    %1374 = vmatprep.subr.mxu0 0.0
    %1375 = vmatpush1.msra.mxu0 0.0
    %1376 = vmatprep.subr.mxu0 0.0
    %1377 = vmatpush1.msra.mxu0 0.0
    %1378 = vmatprep.subr.mxu0 0.0
    %1379 = vmatpush1.msra.mxu0 0.0
    %1380 = vmatprep.subr.mxu0 0.0
    %1381 = vmatpush1.msra.mxu0 0.0
    %1382 = vmatprep.subr.mxu0 0.0
    %1383 = vmatpush1.msra.mxu0 0.0
    %1384 = vmatprep.subr.mxu0 0.0
    %1385 = vmatpush1.msra.mxu0 0.0
    %1386 = vmatprep.subr.mxu0 0.0
    %1387 = vmatpush1.msra.mxu0 0.0
    %1388 = vmatprep.subr.mxu0 0.0
    %1389 = vmatpush1.msra.mxu0 0.0
    %1390 = vmatprep.subr.mxu0 0.0
    %1391 = vmatpush1.msra.mxu0 0.0
    %1392 = vmatprep.subr.mxu0 0.0
    %1393 = vmatpush1.msra.mxu0 0.0
    %1394 = vmatprep.subr.mxu0 0.0
    %1395 = vmatpush1.msra.mxu0 0.0
    %1396 = vmatprep.subr.mxu0 0.0
    %1397 = vmatpush1.msra.mxu0 0.0
    %1398 = vmatprep.subr.mxu0 0.0
    %1399 = vmatpush1.msra.mxu0 0.0
    %1400 = vmatprep.mubr.f32.mxu0 0.0
    %1401 = vmatmul.mubr.f32.gmra.mrb[0].mxu0 %v1313
    %v1402 = vpop.f32.mrb[0].mxu0
    %v1403 = vadd.f32 0.0, %v1402
    %v1404 = vpop.f32.mrb[0].mxu0
    %1405 = vmatprep.mubr.f32.mxu0 0.0
    %1406 = vmatmul.mubr.f32.gmra.mrb[0].mxu0 %v1316
    %v1407 = vpop.f32.mrb[0].mxu0
    %v1408 = vadd.f32 0.0, %v1407
    %v1409 = vpop.f32.mrb[0].mxu0
    %1410 = vmatprep.mubr.f32.mxu0 0.0
    %1411 = vmatmul.mubr.f32.gmra.mrb[0].mxu0 %v1319
    %v1412 = vpop.f32.mrb[0].mxu0
    %v1413 = vadd.f32 0.0, %v1412
    %v1414 = vpop.f32.mrb[0].mxu0
    %1415 = vmatprep.mubr.f32.mxu0 0.0
    %1416 = vmatmul.mubr.f32.gmra.mrb[0].mxu0 %v1322
    %v1417 = vpop.f32.mrb[0].mxu0
    %v1418 = vadd.f32 0.0, %v1417
    %v1419 = vpop.f32.mrb[0].mxu0
    %1420 = vmatprep.mubr.f32.mxu0 0.0
    %1421 = vmatmul.mubr.f32.gmra.mrb[0].mxu0 %v1325
    %v1422 = vpop.f32.mrb[0].mxu0
    %v1423 = vadd.f32 0.0, %v1422
    %v1424 = vpop.f32.mrb[0].mxu0
    %1425 = vmatprep.mubr.f32.mxu0 0.0
    %1426 = vmatmul.mubr.f32.gmra.mrb[0].mxu0 %v1328
    %v1427 = vpop.f32.mrb[0].mxu0
    %v1428 = vadd.f32 0.0, %v1427
    %v1429 = vpop.f32.mrb[0].mxu0
    %1430 = vmatprep.mubr.f32.mxu0 0.0
    %1431 = vmatmul.mubr.f32.gmra.mrb[0].mxu0 %v1331
    %v1432 = vpop.f32.mrb[0].mxu0
    %v1433 = vadd.f32 0.0, %v1432
    %v1434 = vpop.f32.mrb[0].mxu0
    %1435 = vmatprep.mubr.f32.mxu0 0.0
    %1436 = vmatmul.mubr.f32.gmra.mrb[0].mxu0 %v1334
    %v1437 = vpop.f32.mrb[0].mxu0
    %v1438 = vadd.f32 0.0, %v1437
    %v1439 = vpop.f32.mrb[0].mxu0
    %1440 = vdwg.mxu0
    %1449 = vrot.lane.b32.xlu0 %v697, 32
    %v1450 = vpop.permute.xlu0 %1449
    %1451 = vrot.lane.b32.xlu0 %v702, 32
    %v1452 = vpop.permute.xlu0 %1451
    %1453 = vrot.lane.b32.xlu0 %v707, 32
    %v1454 = vpop.permute.xlu0 %1453
    %1455 = vrot.lane.b32.xlu0 %v712, 32
    %v1456 = vpop.permute.xlu0 %1455
    %1457 = vrot.lane.b32.xlu0 %v717, 32
    %v1458 = vpop.permute.xlu0 %1457
    %1459 = vrot.lane.b32.xlu0 %v722, 32
    %v1460 = vpop.permute.xlu0 %1459
    %1461 = vrot.lane.b32.xlu0 %v727, 32
    %v1462 = vpop.permute.xlu0 %1461
    %1463 = vrot.lane.b32.xlu0 %v732, 32
    %v1464 = vpop.permute.xlu0 %1463
    %1481 = vrot.lane.b32.xlu0 %v1050, 64
    %v1482 = vpop.permute.xlu0 %1481
    %1483 = vrot.lane.b32.xlu0 %v1055, 64
    %v1484 = vpop.permute.xlu0 %1483
    %1485 = vrot.lane.b32.xlu0 %v1060, 64
    %v1486 = vpop.permute.xlu0 %1485
    %1487 = vrot.lane.b32.xlu0 %v1065, 64
    %v1488 = vpop.permute.xlu0 %1487
    %1489 = vrot.lane.b32.xlu0 %v1070, 64
    %v1490 = vpop.permute.xlu0 %1489
    %1491 = vrot.lane.b32.xlu0 %v1075, 64
    %v1492 = vpop.permute.xlu0 %1491
    %1493 = vrot.lane.b32.xlu0 %v1080, 64
    %v1494 = vpop.permute.xlu0 %1493
    %1495 = vrot.lane.b32.xlu0 %v1085, 64
    %v1496 = vpop.permute.xlu0 %1495
    %1513 = vrot.lane.b32.xlu0 %v1403, 96
    %v1514 = vpop.permute.xlu0 %1513
    %1515 = vrot.lane.b32.xlu0 %v1408, 96
    %v1516 = vpop.permute.xlu0 %1515
    %1517 = vrot.lane.b32.xlu0 %v1413, 96
    %v1518 = vpop.permute.xlu0 %1517
    %1519 = vrot.lane.b32.xlu0 %v1418, 96
    %v1520 = vpop.permute.xlu0 %1519
    %1521 = vrot.lane.b32.xlu0 %v1423, 96
    %v1522 = vpop.permute.xlu0 %1521
    %1523 = vrot.lane.b32.xlu0 %v1428, 96
    %v1524 = vpop.permute.xlu0 %1523
    %1525 = vrot.lane.b32.xlu0 %v1433, 96
    %v1526 = vpop.permute.xlu0 %1525
    %1527 = vrot.lane.b32.xlu0 %v1438, 96
    %v1528 = vpop.permute.xlu0 %1527
    %v1537 = vsel %vm252, %v344, %v1450
    %v1538 = vsel %vm252, %v349, %v1452
    %v1539 = vsel %vm252, %v354, %v1454
    %v1540 = vsel %vm252, %v359, %v1456
    %v1541 = vsel %vm252, %v364, %v1458
    %v1542 = vsel %vm252, %v369, %v1460
    %v1543 = vsel %vm252, %v374, %v1462
    %v1544 = vsel %vm252, %v379, %v1464
    %vm1545 = vcmask 523264
    %v1546 = vsel %vm1545, %v1537, %v1482
    %v1547 = vsel %vm1545, %v1538, %v1484
    %v1548 = vsel %vm1545, %v1539, %v1486
    %v1549 = vsel %vm1545, %v1540, %v1488
    %v1550 = vsel %vm1545, %v1541, %v1490
    %v1551 = vsel %vm1545, %v1542, %v1492
    %v1552 = vsel %vm1545, %v1543, %v1494
    %v1553 = vsel %vm1545, %v1544, %v1496
    %vm1554 = vcmask 785408
    %v1555 = vsel %vm1554, %v1546, %v1514
    %v1556 = vsel %vm1554, %v1547, %v1516
    %v1557 = vsel %vm1554, %v1548, %v1518
    %v1558 = vsel %vm1554, %v1549, %v1520
    %v1559 = vsel %vm1554, %v1550, %v1522
    %v1560 = vsel %vm1554, %v1551, %v1524
    %v1561 = vsel %vm1554, %v1552, %v1526
    %v1562 = vsel %vm1554, %v1553, %v1528
    %1563 = vst [vmem:[#allocation4] sm:$0xff] %v1555
    %1564 = vst [vmem:[#allocation4 + $0x8] sm:$0xff] %v1556
    %1565 = vst [vmem:[#allocation4 + $0x10] sm:$0xff] %v1557
    %1566 = vst [vmem:[#allocation4 + $0x18] sm:$0xff] %v1558
    %1567 = vst [vmem:[#allocation4 + $0x20] sm:$0xff] %v1559
    %1568 = vst [vmem:[#allocation4 + $0x28] sm:$0xff] %v1560
    %1569 = vst [vmem:[#allocation4 + $0x30] sm:$0xff] %v1561
    %1570 = vst [vmem:[#allocation4 + $0x38] sm:$0xff] %v1562
    // Predicated region
    $region10: #{tpu_custom_call.1} parent=1 // pred_check
      _
    $region11: #{tpu_custom_call.1} parent=1 // pred_check_branch
      %1572 = sbr.rel (0) target = $region13
    $region12: #{tpu_custom_call.1} parent=1 // pred_region
      %s1574 = ssub.s32 1024, 1024
      %1575 = vsyncadd [#allocation5], %s1574
      %s1576 = sshll.u32 [#allocation4], 4
      %s1577 = int_to_ptr.vmem [resolvable:$true] %s1576
      %1582 = dma.vmem_to_hbm [thread:$0]  %s1577, 1024, %s3, [#allocation5], 128, 128, 8
    $region13: #{tpu_custom_call.1} parent=1 // pred_fallthru
      _
    // Predicated region
    $region14: #{tpu_custom_call.1} parent=1 // pred_check
      _
    $region15: #{tpu_custom_call.1} parent=1 // pred_check_branch
      %1584 = sbr.rel (0) target = $region17
    $region16: #{tpu_custom_call.1} parent=1 // pred_region
      %1585 = dma.done [#allocation5], 1024
    $region17: #{tpu_custom_call.1} parent=1 // pred_fallthru
      _
    %1586 = vsyncpa [#allocation5], 1

</llo_original>
